<compile_context>
chip_gen: v6e
topology: v6e:2x2x1
jax: 0.10.0
libtpu: 0.0.40
codegen_flags: <defaults>
</compile_context>

<pallas_src>
import math
import functools

import jax
import jax.numpy as jnp
from jax.experimental import pallas as pl

# --------------------------------------------------------------------------
# Small, module-consistent sizes
# --------------------------------------------------------------------------
B, S, M = 2, 8, 8          # batch, decoder seq len, encoder memory len
D = 32                     # d_model
H = 4                      # num_heads
KQ = 8                     # key_query_dimension (per head)
V = 8                      # value_dimension (per head)
F = 64                     # dim_feedforward
LN_EPS = 1e-5
NEG = -1e30                # additive mask bias (finite, avoids NaN rows)
BS = B * S
BM = B * M
SCALE = 1.0 / math.sqrt(KQ)

# ---- packed-parameter buffer layout (row offsets, all multiples of 8) ----
R_WQKV = 0           # [D, H*(2KQ+V)] = [32, 96]  fused self q|k|v proj (q pre-scaled)
R_WOS = 32           # [H*V, D]       = [32, 32]  self-attn output proj
R_WQC = 64           # [D, H*KQ]      = [32, 32]  cross query proj (pre-scaled)
R_WKV = 96           # [D, H*(KQ+V)]  = [32, 64]  memory k|v proj (grouped)
R_WOC = 128          # [H*V, D]       = [32, 32]  cross-attn output proj
R_W1 = 160           # [D, F]         = [32, 64]
R_W2 = 192           # [F, D]         = [64, 32]
R_B1 = 256           # [1, F]
R_B2 = 257           # [1, D]
R_LNG = 258          # [1, D]
R_LNB = 259          # [1, D]
P_ROWS = 260
P_COLS = 96


# --------------------------------------------------------------------------
# In-kernel helpers
# --------------------------------------------------------------------------
def _mm(a, b):
    return jnp.dot(a, b, preferred_element_type=jnp.float32)


def _nt(a, b):
    # a @ b.T without materialising the transpose
    return jax.lax.dot_general(
        a, b, (((1,), (1,)), ((), ())), preferred_element_type=jnp.float32
    )


def _layer_norm(x, g, b):
    # E[x] / E[x^2] form: the two cross-lane (XLU) reductions are independent.
    mu = jnp.mean(x, axis=-1, keepdims=True)
    ms = jnp.mean(x * x, axis=-1, keepdims=True)
    var = ms - mu * mu
    return (x - mu) * jax.lax.rsqrt(var + LN_EPS) * g + b


def _attend(q, k, v, bias):
    """One attention head over the flattened (block-diagonal) batch.

    q: [Lq, KQ] (already scaled by 1/sqrt(KQ) via the projection weights),
    k: [Lk, KQ], v: [Lk, V],
    bias: [Lq, Lk] additive (dense kq relation * scale + mask as -1e30,
    cross-batch entries -1e30).
    """
    s = _nt(q, k) + bias                                   # [Lq, Lk]
    m = jnp.max(s, axis=-1, keepdims=True)
    p = jnp.exp(s - m)                                     # masked entries -> 0
    denom = jnp.sum(p, axis=-1, keepdims=True)             # [Lq, 1]
    # defer normalization: tiny per-row reciprocal on the EUP
    return _mm(p, v) * pl.reciprocal(denom, approx=True)   # [Lq, V]


# --------------------------------------------------------------------------
# The Pallas kernel: the whole decoder layer, all batches, one grid step
# --------------------------------------------------------------------------
def decoder_layer_kernel(x_ref, mem_ref, bias_s_ref, bias_c_ref, p_ref, out_ref):
    x = x_ref[...]          # [BS, D]
    mem = mem_ref[...]      # [BM, D]

    # ---- self attention (rezero 'off' -> alpha = 1, dropout = identity) ----
    # TODO(synk): sparse edge attention biases (scatter-add over an edge list,
    #   torch index_put accumulate) are not implemented; empty edge lists assumed.
    w_qkv = p_ref[R_WQKV:R_WQKV + D, :]                 # [D, 96]
    qkv = _mm(x, w_qkv)                                 # [BS, 96] grouped q|k|v
    q_all = qkv[:, 0:H * KQ]
    k_all = qkv[:, H * KQ:2 * H * KQ]
    v_all = qkv[:, 2 * H * KQ:2 * H * KQ + H * V]
    ctxs = []
    for h in range(H):                                  # static, unrolled
        ctxs.append(_attend(q_all[:, h * KQ:(h + 1) * KQ],
                            k_all[:, h * KQ:(h + 1) * KQ],
                            v_all[:, h * V:(h + 1) * V],
                            bias_s_ref[h]))
    w_os = p_ref[R_WOS:R_WOS + H * V, 0:D]              # [H*V, D]
    sa = _mm(jnp.concatenate(ctxs, axis=-1), w_os)      # fused out-proj [BS, D]
    x1 = x + sa

    # ---- cross attention to encoder memory (post_self_att_hook callback) ----
    w_qc = p_ref[R_WQC:R_WQC + D, 0:H * KQ]             # [D, H*KQ] (pre-scaled)
    q_c = _mm(x1, w_qc)                                 # [BS, H*KQ]
    w_kv = p_ref[R_WKV:R_WKV + D, 0:H * (KQ + V)]       # [D, H*(KQ+V)]
    kv_m = _mm(mem, w_kv)                               # [BM, H*(KQ+V)] grouped k|v
    kc_all = kv_m[:, 0:H * KQ]
    vc_all = kv_m[:, H * KQ:H * (KQ + V)]
    ctxs = []
    for h in range(H):
        ctxs.append(_attend(q_c[:, h * KQ:(h + 1) * KQ],
                            kc_all[:, h * KQ:(h + 1) * KQ],
                            vc_all[:, h * V:(h + 1) * V],
                            bias_c_ref[h]))
    w_oc = p_ref[R_WOC:R_WOC + H * V, 0:D]              # [H*V, D]
    ca = _mm(jnp.concatenate(ctxs, axis=-1), w_oc)      # [BS, D]
    x2 = x1 + ca

    # ---- postnorm after the attention block ----
    g1 = p_ref[R_LNG:R_LNG + 1, 0:D]                    # [1, D]
    b1n = p_ref[R_LNB:R_LNB + 1, 0:D]                   # [1, D]
    x3 = _layer_norm(x2, g1, b1n)

    # ---- feed-forward (relu) ----
    w1 = p_ref[R_W1:R_W1 + D, 0:F]                      # [D, F]
    b1f = p_ref[R_B1:R_B1 + 1, 0:F]                     # [1, F]
    h1 = jnp.maximum(_mm(x3, w1) + b1f, 0.0)            # [BS, F]
    w2 = p_ref[R_W2:R_W2 + F, 0:D]                      # [F, D]
    b2f = p_ref[R_B2:R_B2 + 1, 0:D]                     # [1, D]
    ff = _mm(h1, w2) + b2f                              # [BS, D]
    x4 = x3 + ff

    # NOTE: the PyTorch reference applies norm1 (not norm2) here as well.
    out_ref[...] = _layer_norm(x4, g1, b1n)


# --------------------------------------------------------------------------
# Parameter setup (deterministic, PyTorch weight layouts)
# --------------------------------------------------------------------------
def init_params(key):
    ks = jax.random.split(key, 9)

    def w(k, shape, scale=0.1):
        return scale * jax.random.normal(k, shape, jnp.float32)

    p = {
        # _selfatt_head_transforms.weight : [H*(2KQ+V), D]
        'w_selfatt': w(ks[0], (H * (2 * KQ + V), D)),
        # self_attn output layer weight   : [D, H*V]
        'w_out_self': w(ks[1], (D, H * V)),
        # _query_transforms.weight        : [H*KQ, D]
        'w_query_cross': w(ks[2], (H * KQ, D)),
        # _multi_head_att_transforms.weight : [H*(KQ+V), D]
        'w_kv_mem': w(ks[3], (H * (KQ + V), D)),
        # multihead_attn output layer weight : [D, H*V]
        'w_out_cross': w(ks[4], (D, H * V)),
        # feed-forward
        'w1': w(ks[5], (F, D)), 'b1': w(ks[6], (F,)),
        'w2': w(ks[7], (D, F)), 'b2': w(ks[8], (D,)),
        # norm1 (norm2 is unused on the postnorm path of the reference code)
        'ln1_g': jnp.ones((D,), jnp.float32),
        'ln1_b': jnp.zeros((D,), jnp.float32),
    }
    return p


def pack_params(p):
    """One-time (not in the hot path) re-layout of all parameters into a single
    contiguous f32 buffer with kernel-friendly (transposed / grouped) layouts.
    The 1/sqrt(KQ) attention scale is folded into the query projections."""
    # self q|k|v projection: [H*(2KQ+V), D] per-head-interleaved -> grouped q|k|v
    w = p['w_selfatt'].reshape(H, 2 * KQ + V, D)
    wq = (w[:, :KQ, :] * SCALE).reshape(H * KQ, D)
    wk = w[:, KQ:2 * KQ, :].reshape(H * KQ, D)
    wv = w[:, 2 * KQ:, :].reshape(H * V, D)
    w_qkv_t = jnp.concatenate([wq, wk, wv], axis=0).T          # [D, 96]

    # memory k|v projection: [H*(KQ+V), D] -> grouped k|v
    wm = p['w_kv_mem'].reshape(H, KQ + V, D)
    wmk = wm[:, :KQ, :].reshape(H * KQ, D)
    wmv = wm[:, KQ:, :].reshape(H * V, D)
    w_kv_t = jnp.concatenate([wmk, wmv], axis=0).T             # [D, 64]

    w_qc_t = (p['w_query_cross'] * SCALE).T                    # [D, H*KQ]

    buf = jnp.zeros((P_ROWS, P_COLS), jnp.float32)
    buf = buf.at[R_WQKV:R_WQKV + D, 0:H * (2 * KQ + V)].set(w_qkv_t)
    buf = buf.at[R_WOS:R_WOS + H * V, 0:D].set(p['w_out_self'].T)
    buf = buf.at[R_WQC:R_WQC + D, 0:H * KQ].set(w_qc_t)
    buf = buf.at[R_WKV:R_WKV + D, 0:H * (KQ + V)].set(w_kv_t)
    buf = buf.at[R_WOC:R_WOC + H * V, 0:D].set(p['w_out_cross'].T)
    buf = buf.at[R_W1:R_W1 + D, 0:F].set(p['w1'].T)
    buf = buf.at[R_W2:R_W2 + F, 0:D].set(p['w2'].T)
    buf = buf.at[R_B1, 0:F].set(p['b1'])
    buf = buf.at[R_B2, 0:D].set(p['b2'])
    buf = buf.at[R_LNG, 0:D].set(p['ln1_g'])
    buf = buf.at[R_LNB, 0:D].set(p['ln1_b'])
    return buf


# --------------------------------------------------------------------------
# Jitted wrapper: flatten batch, fold masks + dense relations (+ scale) into
# additive biases, single pallas_call with 5 operands (no grid).
# --------------------------------------------------------------------------
@jax.jit
def run_decoder_layer(tgt, memory, tgt_mask, mem_mask, dskq, dekq, packed_params):
    x_flat = tgt.reshape(BS, D)
    mem_flat = memory.reshape(BM, D)

    # Combined additive score biases (scale folded in), block-diagonal over batch.
    rel_s = jnp.transpose(dskq, (0, 3, 1, 2)) * SCALE                 # [B,H,S,S]
    blk_s = rel_s + jnp.where(tgt_mask[:, None, :, :], NEG, 0.0)      # [B,H,S,S]
    rel_c = jnp.transpose(dekq, (0, 3, 1, 2)) * SCALE                 # [B,H,S,M]
    blk_c = rel_c + jnp.where(mem_mask[:, None, None, :], NEG, 0.0)   # [B,H,S,M]

    bias_s = jnp.full((H, BS, BS), NEG, jnp.float32)
    bias_c = jnp.full((H, BS, BM), NEG, jnp.float32)
    for b in range(B):   # static unroll, fused under jit
        bias_s = bias_s.at[:, b * S:(b + 1) * S, b * S:(b + 1) * S].set(blk_s[b])
        bias_c = bias_c.at[:, b * S:(b + 1) * S, b * M:(b + 1) * M].set(blk_c[b])

    out_flat = pl.pallas_call(
        decoder_layer_kernel,
        out_shape=jax.ShapeDtypeStruct((BS, D), jnp.float32),
    )(x_flat, mem_flat, bias_s, bias_c, packed_params)
    return out_flat.reshape(B, S, D)


# --------------------------------------------------------------------------
# Pure-JAX reference (mirrors the PyTorch forward exactly for this config)
# --------------------------------------------------------------------------
def reference_forward(p, tgt, memory, tgt_mask, mem_mask, dskq, dekq):
    scale = 1.0 / math.sqrt(KQ)

    def ln(x):
        mu = x.mean(-1, keepdims=True)
        var = ((x - mu) ** 2).mean(-1, keepdims=True)
        return (x - mu) / jnp.sqrt(var + LN_EPS) * p['ln1_g'] + p['ln1_b']

    # self attention
    kqv = (tgt @ p['w_selfatt'].T).reshape(B, S, H, 2 * KQ + V)
    q, k, v = kqv[..., :KQ], kqv[..., KQ:2 * KQ], kqv[..., 2 * KQ:]
    scores = jnp.einsum('bqhd,bkhd->bqkh', q, k) + dskq
    scores = jnp.where(tgt_mask[:, :, :, None], -jnp.inf, scores) * scale
    probs = jax.nn.softmax(scores, axis=2)
    att = jnp.einsum('bqkh,bkhv->bqhv', probs, v).reshape(B, S, H * V)
    src = tgt + att @ p['w_out_self'].T

    # cross attention (post_self_att_hook callback)
    kvm = (memory @ p['w_kv_mem'].T).reshape(B, M, H, KQ + V)
    km, vm = kvm[..., :KQ], kvm[..., KQ:]
    qc = (src @ p['w_query_cross'].T).reshape(B, S, H, KQ)
    cs = jnp.einsum('bqhd,bkhd->bqkh', qc, km) + dekq
    cs = jnp.where(mem_mask[:, None, :, None], -jnp.inf, cs) * scale
    cp = jax.nn.softmax(cs, axis=2)
    catt = jnp.einsum('bqkh,bkhv->bqhv', cp, vm).reshape(B, S, H * V)
    src = src + catt @ p['w_out_cross'].T

    src = ln(src)
    ff = jax.nn.relu(src @ p['w1'].T + p['b1']) @ p['w2'].T + p['b2']
    return ln(src + ff)


# --------------------------------------------------------------------------
if __name__ == "__main__":
    key = jax.random.PRNGKey(0)
    k_tgt, k_mem, k_dskq, k_dekq, k_p = jax.random.split(key, 5)

    tgt = jax.random.normal(k_tgt, (B, S, D), jnp.float32)
    memory = jax.random.normal(k_mem, (B, M, D), jnp.float32)
    # causal self mask: True above the diagonal (masked)
    tgt_mask = jnp.broadcast_to(jnp.triu(jnp.ones((S, S), bool), k=1), (B, S, S))
    # memory mask: mask the last two memory slots of batch 1
    mem_mask = jnp.zeros((B, M), bool).at[1, M - 2:].set(True)
    # dense (all-to-all) kq relations
    dskq = 0.1 * jax.random.normal(k_dskq, (B, S, S, H), jnp.float32)
    dekq = 0.1 * jax.random.normal(k_dekq, (B, S, M, H), jnp.float32)
    # TODO(synk): dense_relations_kv / edge value biases not implemented (left as None).

    params = init_params(k_p)
    packed = pack_params(params)          # one-time weight re-layout (not hot path)

    out = run_decoder_layer(tgt, memory, tgt_mask, mem_mask, dskq, dekq, packed)
    out = jax.block_until_ready(out)

    ref = reference_forward(params, tgt, memory, tgt_mask, mem_mask, dskq, dekq)
    assert out.shape == (B, S, D)
    assert bool(jnp.all(jnp.isfinite(out)))
    max_err = float(jnp.max(jnp.abs(out - ref)))
    if max_err > 2e-2:
        raise SystemExit(f"mismatch vs reference: max abs err = {max_err}")
    print("KERNEL_OK")
</pallas_src>

<mosaic_0001>
module attributes {stable_mosaic.version = 11 : i64} {
  func.func @decoder_layer_kernel(%arg0: memref<16x32xf32, #tpu.memory_space<vmem>>, %arg1: memref<16x32xf32, #tpu.memory_space<vmem>>, %arg2: memref<4x16x16xf32, #tpu.memory_space<vmem>>, %arg3: memref<4x16x16xf32, #tpu.memory_space<vmem>>, %arg4: memref<260x96xf32, #tpu.memory_space<vmem>>, %arg5: memref<16x32xf32, #tpu.memory_space<vmem>>) attributes {dimension_semantics = [], scalar_prefetch = 0 : i64, scratch_operands = 0 : i64, tpu.core_type = #tpu.core_type<tc>} {
    %c0 = arith.constant 0 : index
    %c0_0 = arith.constant 0 : index
    %0 = vector.load %arg0[%c0, %c0_0] : memref<16x32xf32, #tpu.memory_space<vmem>>, vector<16x32xf32>
    %c0_1 = arith.constant 0 : index
    %c0_2 = arith.constant 0 : index
    %1 = vector.load %arg1[%c0_1, %c0_2] : memref<16x32xf32, #tpu.memory_space<vmem>>, vector<16x32xf32>
    %c0_3 = arith.constant 0 : index
    %c0_4 = arith.constant 0 : index
    %2 = vector.load %arg4[%c0_3, %c0_4] : memref<260x96xf32, #tpu.memory_space<vmem>>, vector<32x96xf32>
    %cst = arith.constant dense<0.000000e+00> : vector<16x96xf32>
    %3 = tpu.matmul %0, %2, %cst {dimension_numbers = #tpu.dot_dimension_numbers<[1], [0], [0], [1], [0, 0, 1, 1], [], []>} : vector<16x32xf32>, vector<32x96xf32>, vector<16x96xf32> -> vector<16x96xf32>
    %4 = vector.extract_strided_slice %3 {offsets = [0, 0], sizes = [16, 32], strides = [1, 1]} : vector<16x96xf32> to vector<16x32xf32>
    %5 = vector.extract_strided_slice %3 {offsets = [0, 32], sizes = [16, 32], strides = [1, 1]} : vector<16x96xf32> to vector<16x32xf32>
    %6 = vector.extract_strided_slice %3 {offsets = [0, 64], sizes = [16, 32], strides = [1, 1]} : vector<16x96xf32> to vector<16x32xf32>
    %7 = vector.extract_strided_slice %4 {offsets = [0, 0], sizes = [16, 8], strides = [1, 1]} : vector<16x32xf32> to vector<16x8xf32>
    %8 = vector.extract_strided_slice %5 {offsets = [0, 0], sizes = [16, 8], strides = [1, 1]} : vector<16x32xf32> to vector<16x8xf32>
    %9 = vector.extract_strided_slice %6 {offsets = [0, 0], sizes = [16, 8], strides = [1, 1]} : vector<16x32xf32> to vector<16x8xf32>
    %c0_5 = arith.constant 0 : index
    %c0_6 = arith.constant 0 : index
    %c0_7 = arith.constant 0 : index
    %10 = vector.load %arg2[%c0_5, %c0_6, %c0_7] : memref<4x16x16xf32, #tpu.memory_space<vmem>>, vector<1x16x16xf32>
    %11 = vector.shape_cast %10 : vector<1x16x16xf32> to vector<16x16xf32>
    %cst_8 = arith.constant dense<0.000000e+00> : vector<16x16xf32>
    %12 = tpu.matmul %7, %8, %cst_8 {dimension_numbers = #tpu.dot_dimension_numbers<[1], [1], [0], [0], [0, 0, 1, 0], [], []>} : vector<16x8xf32>, vector<16x8xf32>, vector<16x16xf32> -> vector<16x16xf32>
    %13 = arith.addf %12, %11 : vector<16x16xf32>
    %cst_9 = arith.constant dense<0xFF800000> : vector<16xf32>
    %14 = vector.multi_reduction <maximumf>, %13, %cst_9 [1] : vector<16x16xf32> to vector<16xf32>
    %15 = vector.shape_cast %14 : vector<16xf32> to vector<16x1xf32>
    %16 = vector.broadcast %15 : vector<16x1xf32> to vector<16x16xf32>
    %17 = arith.subf %13, %16 : vector<16x16xf32>
    %18 = math.exp %17 : vector<16x16xf32>
    %cst_10 = arith.constant dense<0.000000e+00> : vector<16xf32>
    %19 = vector.multi_reduction <add>, %18, %cst_10 [1] : vector<16x16xf32> to vector<16xf32>
    %20 = vector.shape_cast %19 : vector<16xf32> to vector<16x1xf32>
    %cst_11 = arith.constant dense<0.000000e+00> : vector<16x8xf32>
    %21 = tpu.matmul %18, %9, %cst_11 {dimension_numbers = #tpu.dot_dimension_numbers<[1], [0], [0], [1], [0, 0, 1, 1], [], []>} : vector<16x16xf32>, vector<16x8xf32>, vector<16x8xf32> -> vector<16x8xf32>
    %22 = tpu.reciprocal %20 {approx = true} : vector<16x1xf32> -> vector<16x1xf32>
    %23 = vector.broadcast %22 : vector<16x1xf32> to vector<16x8xf32>
    %24 = arith.mulf %21, %23 : vector<16x8xf32>
    %25 = vector.extract_strided_slice %4 {offsets = [0, 8], sizes = [16, 8], strides = [1, 1]} : vector<16x32xf32> to vector<16x8xf32>
    %26 = vector.extract_strided_slice %5 {offsets = [0, 8], sizes = [16, 8], strides = [1, 1]} : vector<16x32xf32> to vector<16x8xf32>
    %27 = vector.extract_strided_slice %6 {offsets = [0, 8], sizes = [16, 8], strides = [1, 1]} : vector<16x32xf32> to vector<16x8xf32>
    %c1 = arith.constant 1 : index
    %c0_12 = arith.constant 0 : index
    %c0_13 = arith.constant 0 : index
    %28 = vector.load %arg2[%c1, %c0_12, %c0_13] : memref<4x16x16xf32, #tpu.memory_space<vmem>>, vector<1x16x16xf32>
    %29 = vector.shape_cast %28 : vector<1x16x16xf32> to vector<16x16xf32>
    %cst_14 = arith.constant dense<0.000000e+00> : vector<16x16xf32>
    %30 = tpu.matmul %25, %26, %cst_14 {dimension_numbers = #tpu.dot_dimension_numbers<[1], [1], [0], [0], [0, 0, 1, 0], [], []>} : vector<16x8xf32>, vector<16x8xf32>, vector<16x16xf32> -> vector<16x16xf32>
    %31 = arith.addf %30, %29 : vector<16x16xf32>
    %cst_15 = arith.constant dense<0xFF800000> : vector<16xf32>
    %32 = vector.multi_reduction <maximumf>, %31, %cst_15 [1] : vector<16x16xf32> to vector<16xf32>
    %33 = vector.shape_cast %32 : vector<16xf32> to vector<16x1xf32>
    %34 = vector.broadcast %33 : vector<16x1xf32> to vector<16x16xf32>
    %35 = arith.subf %31, %34 : vector<16x16xf32>
    %36 = math.exp %35 : vector<16x16xf32>
    %cst_16 = arith.constant dense<0.000000e+00> : vector<16xf32>
    %37 = vector.multi_reduction <add>, %36, %cst_16 [1] : vector<16x16xf32> to vector<16xf32>
    %38 = vector.shape_cast %37 : vector<16xf32> to vector<16x1xf32>
    %cst_17 = arith.constant dense<0.000000e+00> : vector<16x8xf32>
    %39 = tpu.matmul %36, %27, %cst_17 {dimension_numbers = #tpu.dot_dimension_numbers<[1], [0], [0], [1], [0, 0, 1, 1], [], []>} : vector<16x16xf32>, vector<16x8xf32>, vector<16x8xf32> -> vector<16x8xf32>
    %40 = tpu.reciprocal %38 {approx = true} : vector<16x1xf32> -> vector<16x1xf32>
    %41 = vector.broadcast %40 : vector<16x1xf32> to vector<16x8xf32>
    %42 = arith.mulf %39, %41 : vector<16x8xf32>
    %43 = vector.extract_strided_slice %4 {offsets = [0, 16], sizes = [16, 8], strides = [1, 1]} : vector<16x32xf32> to vector<16x8xf32>
    %44 = vector.extract_strided_slice %5 {offsets = [0, 16], sizes = [16, 8], strides = [1, 1]} : vector<16x32xf32> to vector<16x8xf32>
    %45 = vector.extract_strided_slice %6 {offsets = [0, 16], sizes = [16, 8], strides = [1, 1]} : vector<16x32xf32> to vector<16x8xf32>
    %c2 = arith.constant 2 : index
    %c0_18 = arith.constant 0 : index
    %c0_19 = arith.constant 0 : index
    %46 = vector.load %arg2[%c2, %c0_18, %c0_19] : memref<4x16x16xf32, #tpu.memory_space<vmem>>, vector<1x16x16xf32>
    %47 = vector.shape_cast %46 : vector<1x16x16xf32> to vector<16x16xf32>
    %cst_20 = arith.constant dense<0.000000e+00> : vector<16x16xf32>
    %48 = tpu.matmul %43, %44, %cst_20 {dimension_numbers = #tpu.dot_dimension_numbers<[1], [1], [0], [0], [0, 0, 1, 0], [], []>} : vector<16x8xf32>, vector<16x8xf32>, vector<16x16xf32> -> vector<16x16xf32>
    %49 = arith.addf %48, %47 : vector<16x16xf32>
    %cst_21 = arith.constant dense<0xFF800000> : vector<16xf32>
    %50 = vector.multi_reduction <maximumf>, %49, %cst_21 [1] : vector<16x16xf32> to vector<16xf32>
    %51 = vector.shape_cast %50 : vector<16xf32> to vector<16x1xf32>
    %52 = vector.broadcast %51 : vector<16x1xf32> to vector<16x16xf32>
    %53 = arith.subf %49, %52 : vector<16x16xf32>
    %54 = math.exp %53 : vector<16x16xf32>
    %cst_22 = arith.constant dense<0.000000e+00> : vector<16xf32>
    %55 = vector.multi_reduction <add>, %54, %cst_22 [1] : vector<16x16xf32> to vector<16xf32>
    %56 = vector.shape_cast %55 : vector<16xf32> to vector<16x1xf32>
    %cst_23 = arith.constant dense<0.000000e+00> : vector<16x8xf32>
    %57 = tpu.matmul %54, %45, %cst_23 {dimension_numbers = #tpu.dot_dimension_numbers<[1], [0], [0], [1], [0, 0, 1, 1], [], []>} : vector<16x16xf32>, vector<16x8xf32>, vector<16x8xf32> -> vector<16x8xf32>
    %58 = tpu.reciprocal %56 {approx = true} : vector<16x1xf32> -> vector<16x1xf32>
    %59 = vector.broadcast %58 : vector<16x1xf32> to vector<16x8xf32>
    %60 = arith.mulf %57, %59 : vector<16x8xf32>
    %61 = vector.extract_strided_slice %4 {offsets = [0, 24], sizes = [16, 8], strides = [1, 1]} : vector<16x32xf32> to vector<16x8xf32>
    %62 = vector.extract_strided_slice %5 {offsets = [0, 24], sizes = [16, 8], strides = [1, 1]} : vector<16x32xf32> to vector<16x8xf32>
    %63 = vector.extract_strided_slice %6 {offsets = [0, 24], sizes = [16, 8], strides = [1, 1]} : vector<16x32xf32> to vector<16x8xf32>
    %c3 = arith.constant 3 : index
    %c0_24 = arith.constant 0 : index
    %c0_25 = arith.constant 0 : index
    %64 = vector.load %arg2[%c3, %c0_24, %c0_25] : memref<4x16x16xf32, #tpu.memory_space<vmem>>, vector<1x16x16xf32>
    %65 = vector.shape_cast %64 : vector<1x16x16xf32> to vector<16x16xf32>
    %cst_26 = arith.constant dense<0.000000e+00> : vector<16x16xf32>
    %66 = tpu.matmul %61, %62, %cst_26 {dimension_numbers = #tpu.dot_dimension_numbers<[1], [1], [0], [0], [0, 0, 1, 0], [], []>} : vector<16x8xf32>, vector<16x8xf32>, vector<16x16xf32> -> vector<16x16xf32>
    %67 = arith.addf %66, %65 : vector<16x16xf32>
    %cst_27 = arith.constant dense<0xFF800000> : vector<16xf32>
    %68 = vector.multi_reduction <maximumf>, %67, %cst_27 [1] : vector<16x16xf32> to vector<16xf32>
    %69 = vector.shape_cast %68 : vector<16xf32> to vector<16x1xf32>
    %70 = vector.broadcast %69 : vector<16x1xf32> to vector<16x16xf32>
    %71 = arith.subf %67, %70 : vector<16x16xf32>
    %72 = math.exp %71 : vector<16x16xf32>
    %cst_28 = arith.constant dense<0.000000e+00> : vector<16xf32>
    %73 = vector.multi_reduction <add>, %72, %cst_28 [1] : vector<16x16xf32> to vector<16xf32>
    %74 = vector.shape_cast %73 : vector<16xf32> to vector<16x1xf32>
    %cst_29 = arith.constant dense<0.000000e+00> : vector<16x8xf32>
    %75 = tpu.matmul %72, %63, %cst_29 {dimension_numbers = #tpu.dot_dimension_numbers<[1], [0], [0], [1], [0, 0, 1, 1], [], []>} : vector<16x16xf32>, vector<16x8xf32>, vector<16x8xf32> -> vector<16x8xf32>
    %76 = tpu.reciprocal %74 {approx = true} : vector<16x1xf32> -> vector<16x1xf32>
    %77 = vector.broadcast %76 : vector<16x1xf32> to vector<16x8xf32>
    %78 = arith.mulf %75, %77 : vector<16x8xf32>
    %c32 = arith.constant 32 : index
    %c0_30 = arith.constant 0 : index
    %79 = vector.load %arg4[%c32, %c0_30] : memref<260x96xf32, #tpu.memory_space<vmem>>, vector<32x32xf32>
    %80 = tpu.concatenate %24, %42, %60, %78 in 1 : vector<16x8xf32>, vector<16x8xf32>, vector<16x8xf32>, vector<16x8xf32> -> vector<16x32xf32>
    %cst_31 = arith.constant dense<0.000000e+00> : vector<16x32xf32>
    %81 = tpu.matmul %80, %79, %cst_31 {dimension_numbers = #tpu.dot_dimension_numbers<[1], [0], [0], [1], [0, 0, 1, 1], [], []>} : vector<16x32xf32>, vector<32x32xf32>, vector<16x32xf32> -> vector<16x32xf32>
    %82 = arith.addf %0, %81 : vector<16x32xf32>
    %c64 = arith.constant 64 : index
    %c0_32 = arith.constant 0 : index
    %83 = vector.load %arg4[%c64, %c0_32] : memref<260x96xf32, #tpu.memory_space<vmem>>, vector<32x32xf32>
    %cst_33 = arith.constant dense<0.000000e+00> : vector<16x32xf32>
    %84 = tpu.matmul %82, %83, %cst_33 {dimension_numbers = #tpu.dot_dimension_numbers<[1], [0], [0], [1], [0, 0, 1, 1], [], []>} : vector<16x32xf32>, vector<32x32xf32>, vector<16x32xf32> -> vector<16x32xf32>
    %c96 = arith.constant 96 : index
    %c0_34 = arith.constant 0 : index
    %85 = vector.load %arg4[%c96, %c0_34] : memref<260x96xf32, #tpu.memory_space<vmem>>, vector<32x64xf32>
    %cst_35 = arith.constant dense<0.000000e+00> : vector<16x64xf32>
    %86 = tpu.matmul %1, %85, %cst_35 {dimension_numbers = #tpu.dot_dimension_numbers<[1], [0], [0], [1], [0, 0, 1, 1], [], []>} : vector<16x32xf32>, vector<32x64xf32>, vector<16x64xf32> -> vector<16x64xf32>
    %87 = vector.extract_strided_slice %86 {offsets = [0, 0], sizes = [16, 32], strides = [1, 1]} : vector<16x64xf32> to vector<16x32xf32>
    %88 = vector.extract_strided_slice %86 {offsets = [0, 32], sizes = [16, 32], strides = [1, 1]} : vector<16x64xf32> to vector<16x32xf32>
    %89 = vector.extract_strided_slice %84 {offsets = [0, 0], sizes = [16, 8], strides = [1, 1]} : vector<16x32xf32> to vector<16x8xf32>
    %90 = vector.extract_strided_slice %87 {offsets = [0, 0], sizes = [16, 8], strides = [1, 1]} : vector<16x32xf32> to vector<16x8xf32>
    %91 = vector.extract_strided_slice %88 {offsets = [0, 0], sizes = [16, 8], strides = [1, 1]} : vector<16x32xf32> to vector<16x8xf32>
    %c0_36 = arith.constant 0 : index
    %c0_37 = arith.constant 0 : index
    %c0_38 = arith.constant 0 : index
    %92 = vector.load %arg3[%c0_36, %c0_37, %c0_38] : memref<4x16x16xf32, #tpu.memory_space<vmem>>, vector<1x16x16xf32>
    %93 = vector.shape_cast %92 : vector<1x16x16xf32> to vector<16x16xf32>
    %cst_39 = arith.constant dense<0.000000e+00> : vector<16x16xf32>
    %94 = tpu.matmul %89, %90, %cst_39 {dimension_numbers = #tpu.dot_dimension_numbers<[1], [1], [0], [0], [0, 0, 1, 0], [], []>} : vector<16x8xf32>, vector<16x8xf32>, vector<16x16xf32> -> vector<16x16xf32>
    %95 = arith.addf %94, %93 : vector<16x16xf32>
    %cst_40 = arith.constant dense<0xFF800000> : vector<16xf32>
    %96 = vector.multi_reduction <maximumf>, %95, %cst_40 [1] : vector<16x16xf32> to vector<16xf32>
    %97 = vector.shape_cast %96 : vector<16xf32> to vector<16x1xf32>
    %98 = vector.broadcast %97 : vector<16x1xf32> to vector<16x16xf32>
    %99 = arith.subf %95, %98 : vector<16x16xf32>
    %100 = math.exp %99 : vector<16x16xf32>
    %cst_41 = arith.constant dense<0.000000e+00> : vector<16xf32>
    %101 = vector.multi_reduction <add>, %100, %cst_41 [1] : vector<16x16xf32> to vector<16xf32>
    %102 = vector.shape_cast %101 : vector<16xf32> to vector<16x1xf32>
    %cst_42 = arith.constant dense<0.000000e+00> : vector<16x8xf32>
    %103 = tpu.matmul %100, %91, %cst_42 {dimension_numbers = #tpu.dot_dimension_numbers<[1], [0], [0], [1], [0, 0, 1, 1], [], []>} : vector<16x16xf32>, vector<16x8xf32>, vector<16x8xf32> -> vector<16x8xf32>
    %104 = tpu.reciprocal %102 {approx = true} : vector<16x1xf32> -> vector<16x1xf32>
    %105 = vector.broadcast %104 : vector<16x1xf32> to vector<16x8xf32>
    %106 = arith.mulf %103, %105 : vector<16x8xf32>
    %107 = vector.extract_strided_slice %84 {offsets = [0, 8], sizes = [16, 8], strides = [1, 1]} : vector<16x32xf32> to vector<16x8xf32>
    %108 = vector.extract_strided_slice %87 {offsets = [0, 8], sizes = [16, 8], strides = [1, 1]} : vector<16x32xf32> to vector<16x8xf32>
    %109 = vector.extract_strided_slice %88 {offsets = [0, 8], sizes = [16, 8], strides = [1, 1]} : vector<16x32xf32> to vector<16x8xf32>
    %c1_43 = arith.constant 1 : index
    %c0_44 = arith.constant 0 : index
    %c0_45 = arith.constant 0 : index
    %110 = vector.load %arg3[%c1_43, %c0_44, %c0_45] : memref<4x16x16xf32, #tpu.memory_space<vmem>>, vector<1x16x16xf32>
    %111 = vector.shape_cast %110 : vector<1x16x16xf32> to vector<16x16xf32>
    %cst_46 = arith.constant dense<0.000000e+00> : vector<16x16xf32>
    %112 = tpu.matmul %107, %108, %cst_46 {dimension_numbers = #tpu.dot_dimension_numbers<[1], [1], [0], [0], [0, 0, 1, 0], [], []>} : vector<16x8xf32>, vector<16x8xf32>, vector<16x16xf32> -> vector<16x16xf32>
    %113 = arith.addf %112, %111 : vector<16x16xf32>
    %cst_47 = arith.constant dense<0xFF800000> : vector<16xf32>
    %114 = vector.multi_reduction <maximumf>, %113, %cst_47 [1] : vector<16x16xf32> to vector<16xf32>
    %115 = vector.shape_cast %114 : vector<16xf32> to vector<16x1xf32>
    %116 = vector.broadcast %115 : vector<16x1xf32> to vector<16x16xf32>
    %117 = arith.subf %113, %116 : vector<16x16xf32>
    %118 = math.exp %117 : vector<16x16xf32>
    %cst_48 = arith.constant dense<0.000000e+00> : vector<16xf32>
    %119 = vector.multi_reduction <add>, %118, %cst_48 [1] : vector<16x16xf32> to vector<16xf32>
    %120 = vector.shape_cast %119 : vector<16xf32> to vector<16x1xf32>
    %cst_49 = arith.constant dense<0.000000e+00> : vector<16x8xf32>
    %121 = tpu.matmul %118, %109, %cst_49 {dimension_numbers = #tpu.dot_dimension_numbers<[1], [0], [0], [1], [0, 0, 1, 1], [], []>} : vector<16x16xf32>, vector<16x8xf32>, vector<16x8xf32> -> vector<16x8xf32>
    %122 = tpu.reciprocal %120 {approx = true} : vector<16x1xf32> -> vector<16x1xf32>
    %123 = vector.broadcast %122 : vector<16x1xf32> to vector<16x8xf32>
    %124 = arith.mulf %121, %123 : vector<16x8xf32>
    %125 = vector.extract_strided_slice %84 {offsets = [0, 16], sizes = [16, 8], strides = [1, 1]} : vector<16x32xf32> to vector<16x8xf32>
    %126 = vector.extract_strided_slice %87 {offsets = [0, 16], sizes = [16, 8], strides = [1, 1]} : vector<16x32xf32> to vector<16x8xf32>
    %127 = vector.extract_strided_slice %88 {offsets = [0, 16], sizes = [16, 8], strides = [1, 1]} : vector<16x32xf32> to vector<16x8xf32>
    %c2_50 = arith.constant 2 : index
    %c0_51 = arith.constant 0 : index
    %c0_52 = arith.constant 0 : index
    %128 = vector.load %arg3[%c2_50, %c0_51, %c0_52] : memref<4x16x16xf32, #tpu.memory_space<vmem>>, vector<1x16x16xf32>
    %129 = vector.shape_cast %128 : vector<1x16x16xf32> to vector<16x16xf32>
    %cst_53 = arith.constant dense<0.000000e+00> : vector<16x16xf32>
    %130 = tpu.matmul %125, %126, %cst_53 {dimension_numbers = #tpu.dot_dimension_numbers<[1], [1], [0], [0], [0, 0, 1, 0], [], []>} : vector<16x8xf32>, vector<16x8xf32>, vector<16x16xf32> -> vector<16x16xf32>
    %131 = arith.addf %130, %129 : vector<16x16xf32>
    %cst_54 = arith.constant dense<0xFF800000> : vector<16xf32>
    %132 = vector.multi_reduction <maximumf>, %131, %cst_54 [1] : vector<16x16xf32> to vector<16xf32>
    %133 = vector.shape_cast %132 : vector<16xf32> to vector<16x1xf32>
    %134 = vector.broadcast %133 : vector<16x1xf32> to vector<16x16xf32>
    %135 = arith.subf %131, %134 : vector<16x16xf32>
    %136 = math.exp %135 : vector<16x16xf32>
    %cst_55 = arith.constant dense<0.000000e+00> : vector<16xf32>
    %137 = vector.multi_reduction <add>, %136, %cst_55 [1] : vector<16x16xf32> to vector<16xf32>
    %138 = vector.shape_cast %137 : vector<16xf32> to vector<16x1xf32>
    %cst_56 = arith.constant dense<0.000000e+00> : vector<16x8xf32>
    %139 = tpu.matmul %136, %127, %cst_56 {dimension_numbers = #tpu.dot_dimension_numbers<[1], [0], [0], [1], [0, 0, 1, 1], [], []>} : vector<16x16xf32>, vector<16x8xf32>, vector<16x8xf32> -> vector<16x8xf32>
    %140 = tpu.reciprocal %138 {approx = true} : vector<16x1xf32> -> vector<16x1xf32>
    %141 = vector.broadcast %140 : vector<16x1xf32> to vector<16x8xf32>
    %142 = arith.mulf %139, %141 : vector<16x8xf32>
    %143 = vector.extract_strided_slice %84 {offsets = [0, 24], sizes = [16, 8], strides = [1, 1]} : vector<16x32xf32> to vector<16x8xf32>
    %144 = vector.extract_strided_slice %87 {offsets = [0, 24], sizes = [16, 8], strides = [1, 1]} : vector<16x32xf32> to vector<16x8xf32>
    %145 = vector.extract_strided_slice %88 {offsets = [0, 24], sizes = [16, 8], strides = [1, 1]} : vector<16x32xf32> to vector<16x8xf32>
    %c3_57 = arith.constant 3 : index
    %c0_58 = arith.constant 0 : index
    %c0_59 = arith.constant 0 : index
    %146 = vector.load %arg3[%c3_57, %c0_58, %c0_59] : memref<4x16x16xf32, #tpu.memory_space<vmem>>, vector<1x16x16xf32>
    %147 = vector.shape_cast %146 : vector<1x16x16xf32> to vector<16x16xf32>
    %cst_60 = arith.constant dense<0.000000e+00> : vector<16x16xf32>
    %148 = tpu.matmul %143, %144, %cst_60 {dimension_numbers = #tpu.dot_dimension_numbers<[1], [1], [0], [0], [0, 0, 1, 0], [], []>} : vector<16x8xf32>, vector<16x8xf32>, vector<16x16xf32> -> vector<16x16xf32>
    %149 = arith.addf %148, %147 : vector<16x16xf32>
    %cst_61 = arith.constant dense<0xFF800000> : vector<16xf32>
    %150 = vector.multi_reduction <maximumf>, %149, %cst_61 [1] : vector<16x16xf32> to vector<16xf32>
    %151 = vector.shape_cast %150 : vector<16xf32> to vector<16x1xf32>
    %152 = vector.broadcast %151 : vector<16x1xf32> to vector<16x16xf32>
    %153 = arith.subf %149, %152 : vector<16x16xf32>
    %154 = math.exp %153 : vector<16x16xf32>
    %cst_62 = arith.constant dense<0.000000e+00> : vector<16xf32>
    %155 = vector.multi_reduction <add>, %154, %cst_62 [1] : vector<16x16xf32> to vector<16xf32>
    %156 = vector.shape_cast %155 : vector<16xf32> to vector<16x1xf32>
    %cst_63 = arith.constant dense<0.000000e+00> : vector<16x8xf32>
    %157 = tpu.matmul %154, %145, %cst_63 {dimension_numbers = #tpu.dot_dimension_numbers<[1], [0], [0], [1], [0, 0, 1, 1], [], []>} : vector<16x16xf32>, vector<16x8xf32>, vector<16x8xf32> -> vector<16x8xf32>
    %158 = tpu.reciprocal %156 {approx = true} : vector<16x1xf32> -> vector<16x1xf32>
    %159 = vector.broadcast %158 : vector<16x1xf32> to vector<16x8xf32>
    %160 = arith.mulf %157, %159 : vector<16x8xf32>
    %c128 = arith.constant 128 : index
    %c0_64 = arith.constant 0 : index
    %161 = vector.load %arg4[%c128, %c0_64] : memref<260x96xf32, #tpu.memory_space<vmem>>, vector<32x32xf32>
    %162 = tpu.concatenate %106, %124, %142, %160 in 1 : vector<16x8xf32>, vector<16x8xf32>, vector<16x8xf32>, vector<16x8xf32> -> vector<16x32xf32>
    %cst_65 = arith.constant dense<0.000000e+00> : vector<16x32xf32>
    %163 = tpu.matmul %162, %161, %cst_65 {dimension_numbers = #tpu.dot_dimension_numbers<[1], [0], [0], [1], [0, 0, 1, 1], [], []>} : vector<16x32xf32>, vector<32x32xf32>, vector<16x32xf32> -> vector<16x32xf32>
    %164 = arith.addf %82, %163 : vector<16x32xf32>
    %c258 = arith.constant 258 : index
    %c0_66 = arith.constant 0 : index
    %165 = vector.load %arg4[%c258, %c0_66] : memref<260x96xf32, #tpu.memory_space<vmem>>, vector<1x32xf32>
    %c259 = arith.constant 259 : index
    %c0_67 = arith.constant 0 : index
    %166 = vector.load %arg4[%c259, %c0_67] : memref<260x96xf32, #tpu.memory_space<vmem>>, vector<1x32xf32>
    %cst_68 = arith.constant dense<0.000000e+00> : vector<16xf32>
    %167 = vector.multi_reduction <add>, %164, %cst_68 [1] : vector<16x32xf32> to vector<16xf32>
    %168 = vector.shape_cast %167 : vector<16xf32> to vector<16x1xf32>
    %cst_69 = arith.constant 3.200000e+01 : f32
    %169 = vector.broadcast %cst_69 : f32 to vector<16x1xf32>
    %170 = arith.divf %168, %169 : vector<16x1xf32>
    %171 = arith.mulf %164, %164 : vector<16x32xf32>
    %cst_70 = arith.constant dense<0.000000e+00> : vector<16xf32>
    %172 = vector.multi_reduction <add>, %171, %cst_70 [1] : vector<16x32xf32> to vector<16xf32>
    %173 = vector.shape_cast %172 : vector<16xf32> to vector<16x1xf32>
    %cst_71 = arith.constant 3.200000e+01 : f32
    %174 = vector.broadcast %cst_71 : f32 to vector<16x1xf32>
    %175 = arith.divf %173, %174 : vector<16x1xf32>
    %176 = arith.mulf %170, %170 : vector<16x1xf32>
    %177 = arith.subf %175, %176 : vector<16x1xf32>
    %178 = vector.broadcast %170 : vector<16x1xf32> to vector<16x32xf32>
    %179 = arith.subf %164, %178 : vector<16x32xf32>
    %cst_72 = arith.constant 9.99999974E-6 : f32
    %180 = vector.broadcast %cst_72 : f32 to vector<16x1xf32>
    %181 = arith.addf %177, %180 : vector<16x1xf32>
    %182 = math.rsqrt %181 : vector<16x1xf32>
    %183 = vector.broadcast %182 : vector<16x1xf32> to vector<16x32xf32>
    %184 = arith.mulf %179, %183 : vector<16x32xf32>
    %185 = vector.broadcast %165 : vector<1x32xf32> to vector<16x32xf32>
    %186 = arith.mulf %184, %185 : vector<16x32xf32>
    %187 = vector.broadcast %166 : vector<1x32xf32> to vector<16x32xf32>
    %188 = arith.addf %186, %187 : vector<16x32xf32>
    %c160 = arith.constant 160 : index
    %c0_73 = arith.constant 0 : index
    %189 = vector.load %arg4[%c160, %c0_73] : memref<260x96xf32, #tpu.memory_space<vmem>>, vector<32x64xf32>
    %c256 = arith.constant 256 : index
    %c0_74 = arith.constant 0 : index
    %190 = vector.load %arg4[%c256, %c0_74] : memref<260x96xf32, #tpu.memory_space<vmem>>, vector<1x64xf32>
    %cst_75 = arith.constant dense<0.000000e+00> : vector<16x64xf32>
    %191 = tpu.matmul %188, %189, %cst_75 {dimension_numbers = #tpu.dot_dimension_numbers<[1], [0], [0], [1], [0, 0, 1, 1], [], []>} : vector<16x32xf32>, vector<32x64xf32>, vector<16x64xf32> -> vector<16x64xf32>
    %192 = vector.broadcast %190 : vector<1x64xf32> to vector<16x64xf32>
    %193 = arith.addf %191, %192 : vector<16x64xf32>
    %cst_76 = arith.constant 0.000000e+00 : f32
    %194 = vector.broadcast %cst_76 : f32 to vector<16x64xf32>
    %195 = arith.maximumf %193, %194 : vector<16x64xf32>
    %c192 = arith.constant 192 : index
    %c0_77 = arith.constant 0 : index
    %196 = vector.load %arg4[%c192, %c0_77] : memref<260x96xf32, #tpu.memory_space<vmem>>, vector<64x32xf32>
    %c257 = arith.constant 257 : index
    %c0_78 = arith.constant 0 : index
    %197 = vector.load %arg4[%c257, %c0_78] : memref<260x96xf32, #tpu.memory_space<vmem>>, vector<1x32xf32>
    %cst_79 = arith.constant dense<0.000000e+00> : vector<16x32xf32>
    %198 = tpu.matmul %195, %196, %cst_79 {dimension_numbers = #tpu.dot_dimension_numbers<[1], [0], [0], [1], [0, 0, 1, 1], [], []>} : vector<16x64xf32>, vector<64x32xf32>, vector<16x32xf32> -> vector<16x32xf32>
    %199 = vector.broadcast %197 : vector<1x32xf32> to vector<16x32xf32>
    %200 = arith.addf %198, %199 : vector<16x32xf32>
    %201 = arith.addf %188, %200 : vector<16x32xf32>
    %cst_80 = arith.constant dense<0.000000e+00> : vector<16xf32>
    %202 = vector.multi_reduction <add>, %201, %cst_80 [1] : vector<16x32xf32> to vector<16xf32>
    %203 = vector.shape_cast %202 : vector<16xf32> to vector<16x1xf32>
    %cst_81 = arith.constant 3.200000e+01 : f32
    %204 = vector.broadcast %cst_81 : f32 to vector<16x1xf32>
    %205 = arith.divf %203, %204 : vector<16x1xf32>
    %206 = arith.mulf %201, %201 : vector<16x32xf32>
    %cst_82 = arith.constant dense<0.000000e+00> : vector<16xf32>
    %207 = vector.multi_reduction <add>, %206, %cst_82 [1] : vector<16x32xf32> to vector<16xf32>
    %208 = vector.shape_cast %207 : vector<16xf32> to vector<16x1xf32>
    %cst_83 = arith.constant 3.200000e+01 : f32
    %209 = vector.broadcast %cst_83 : f32 to vector<16x1xf32>
    %210 = arith.divf %208, %209 : vector<16x1xf32>
    %211 = arith.mulf %205, %205 : vector<16x1xf32>
    %212 = arith.subf %210, %211 : vector<16x1xf32>
    %213 = vector.broadcast %205 : vector<16x1xf32> to vector<16x32xf32>
    %214 = arith.subf %201, %213 : vector<16x32xf32>
    %cst_84 = arith.constant 9.99999974E-6 : f32
    %215 = vector.broadcast %cst_84 : f32 to vector<16x1xf32>
    %216 = arith.addf %212, %215 : vector<16x1xf32>
    %217 = math.rsqrt %216 : vector<16x1xf32>
    %218 = vector.broadcast %217 : vector<16x1xf32> to vector<16x32xf32>
    %219 = arith.mulf %214, %218 : vector<16x32xf32>
    %220 = vector.broadcast %165 : vector<1x32xf32> to vector<16x32xf32>
    %221 = arith.mulf %219, %220 : vector<16x32xf32>
    %222 = vector.broadcast %166 : vector<1x32xf32> to vector<16x32xf32>
    %223 = arith.addf %221, %222 : vector<16x32xf32>
    %c0_85 = arith.constant 0 : index
    %c0_86 = arith.constant 0 : index
    %224 = vector.load %arg5[%c0_85, %c0_86] : memref<16x32xf32, #tpu.memory_space<vmem>>, vector<16x32xf32>
    tpu.vector_store %arg5[%c0_85, %c0_86], %223 {strides = array<i32>} : memref<16x32xf32, #tpu.memory_space<vmem>>, vector<16x32xf32>,
    return
  }
}

</mosaic_0001>

<llo_original>
// kernel: run_decoder_layer.1
$region0: #{run_decoder_layer.1}
  #allocation0 [shape = 'u32[]', space=smem, size = 0x4, offset = 0x4, fixed_abs, tag = 'smem constant byte address 0x4 - core index']
  #allocation1 [shape = 'u32[144,128]{1,0:T(1,128)}', space=vmem, size = 0x12000, scoped, tag = 'internal scratch']
  %s0 = inlined_call_operand.vmem [shape: f32[16,32], index: 0, kind: input, shape index: {}]
  %s1 = inlined_call_operand.vmem [shape: f32[16,32], index: 1, kind: input, shape index: {}]
  %s2 = inlined_call_operand.vmem [shape: f32[4,16,16], index: 2, kind: input, shape index: {}]
  %s3 = inlined_call_operand.vmem [shape: f32[4,16,16], index: 3, kind: input, shape index: {}]
  %s4 = inlined_call_operand.vmem [shape: f32[260,96], index: 4, kind: input, shape index: {}]
  %s5 = inlined_call_operand.hbm [shape: f32[16,32], index: 5, kind: output, shape index: {}]
  %s6 = sld [smem:[#allocation0]]
  $region30: #{run_decoder_layer.1} parent=0
    _
  %s8 = ssub.s32 1, %s6
  %s9 = scalar_select 0, %s8, %s6
  $region1: #{run_decoder_layer.1} parent=0
    #allocation2 [shape = 'u8[8192]{0}', space=vmem, size = 0x2000, scoped, tag = 'output window, operand 0, single buffered']
    #allocation3 [shape = 's32[1]{0}', space=sflag, size = 0x4, scoped, tag = 'scoped memory for run_decoder_layer.1']
    %10 = vsyncpa [#allocation3], 0
    // Predicated region
    $region2: #{run_decoder_layer.1} parent=1 // pred_check
      _
    $region3: #{run_decoder_layer.1} parent=1 // pred_check_branch
      %12 = sbr.rel (0) target = $region5
    $region4: #{run_decoder_layer.1} parent=1 // pred_region
      _
    $region5: #{run_decoder_layer.1} parent=1 // pred_fallthru
      _
    // Predicated region
    $region6: #{run_decoder_layer.1} parent=1 // pred_check
      _
    $region7: #{run_decoder_layer.1} parent=1 // pred_check_branch
      %14 = sbr.rel (0) target = $region9
    $region8: #{run_decoder_layer.1} parent=1 // pred_region
      _
    $region9: #{run_decoder_layer.1} parent=1 // pred_fallthru
      _
    // Predicated region
    $region10: #{run_decoder_layer.1} parent=1 // pred_check
      _
    $region11: #{run_decoder_layer.1} parent=1 // pred_check_branch
      %16 = sbr.rel (0) target = $region13
    $region12: #{run_decoder_layer.1} parent=1 // pred_region
      _
    $region13: #{run_decoder_layer.1} parent=1 // pred_fallthru
      _
    // Predicated region
    $region14: #{run_decoder_layer.1} parent=1 // pred_check
      _
    $region15: #{run_decoder_layer.1} parent=1 // pred_check_branch
      %18 = sbr.rel (0) target = $region17
    $region16: #{run_decoder_layer.1} parent=1 // pred_region
      _
    $region17: #{run_decoder_layer.1} parent=1 // pred_fallthru
      _
    // Predicated region
    $region18: #{run_decoder_layer.1} parent=1 // pred_check
      _
    $region19: #{run_decoder_layer.1} parent=1 // pred_check_branch
      %20 = sbr.rel (0) target = $region21
    $region20: #{run_decoder_layer.1} parent=1 // pred_region
      _
    $region21: #{run_decoder_layer.1} parent=1 // pred_fallthru
      _
    %v21 = vld [vmem:[%s0] sm:$0xff]
    %v22 = vld [vmem:[%s0 + $0x8] sm:$0xff]
    %v23 = vld [vmem:[%s1] sm:$0xff]
    %v24 = vld [vmem:[%s1 + $0x8] sm:$0xff]
    %v25 = vld [vmem:[%s4] sm:$0xff]
    %v26 = vld [vmem:[%s4 + $0x8] sm:$0xff]
    %v27 = vld [vmem:[%s4 + $0x10] sm:$0xff]
    %v28 = vld [vmem:[%s4 + $0x18] sm:$0xff]
    %vm29 = vcmask 261120
    %v31 = vsel %vm29, %v21, 0
    %v34 = vsel %vm29, %v22, 0
    %36 = vmatprep.subr.mxu0 0.0
    %37 = vmatpush1.msra.mxu0 0.0
    %38 = vmatprep.subr.mxu0 0.0
    %39 = vmatpush1.msra.mxu0 0.0
    %40 = vmatprep.subr.mxu0 0.0
    %41 = vmatpush1.msra.mxu0 0.0
    %42 = vmatprep.subr.mxu0 0.0
    %43 = vmatpush1.msra.mxu0 0.0
    %44 = vmatprep.subr.mxu0 0.0
    %45 = vmatpush1.msra.mxu0 0.0
    %46 = vmatprep.subr.mxu0 0.0
    %47 = vmatpush1.msra.mxu0 0.0
    %48 = vmatprep.subr.mxu0 0.0
    %49 = vmatpush1.msra.mxu0 0.0
    %50 = vmatprep.subr.mxu0 0.0
    %51 = vmatpush1.msra.mxu0 0.0
    %52 = vmatprep.subr.mxu0 0.0
    %53 = vmatpush1.msra.mxu0 0.0
    %54 = vmatprep.subr.mxu0 0.0
    %55 = vmatpush1.msra.mxu0 0.0
    %56 = vmatprep.subr.mxu0 0.0
    %57 = vmatpush1.msra.mxu0 0.0
    %58 = vmatprep.subr.mxu0 0.0
    %59 = vmatpush1.msra.mxu0 0.0
    %60 = vmatprep.subr.mxu0 0.0
    %61 = vmatpush1.msra.mxu0 %v28
    %62 = vmatprep.subr.mxu0 0.0
    %63 = vmatpush1.msra.mxu0 %v27
    %64 = vmatprep.subr.mxu0 0.0
    %65 = vmatpush1.msra.mxu0 %v26
    %66 = vmatprep.subr.mxu0 0.0
    %67 = vmatpush1.msra.mxu0 %v25
    %68 = vmatprep.subr.mxu0 0.0
    %69 = vmatpush2.msra.mxu0 0.0
    %70 = vmatprep.subr.mxu0 0.0
    %71 = vmatpush2.msra.mxu0 0.0
    %72 = vmatprep.subr.mxu0 0.0
    %73 = vmatpush2.msra.mxu0 0.0
    %74 = vmatprep.subr.mxu0 0.0
    %75 = vmatpush2.msra.mxu0 0.0
    %76 = vmatprep.subr.mxu0 0.0
    %77 = vmatpush2.msra.mxu0 0.0
    %78 = vmatprep.subr.mxu0 0.0
    %79 = vmatpush2.msra.mxu0 0.0
    %80 = vmatprep.subr.mxu0 0.0
    %81 = vmatpush2.msra.mxu0 0.0
    %82 = vmatprep.subr.mxu0 0.0
    %83 = vmatpush2.msra.mxu0 0.0
    %84 = vmatprep.subr.mxu0 0.0
    %85 = vmatpush2.msra.mxu0 0.0
    %86 = vmatprep.subr.mxu0 0.0
    %87 = vmatpush2.msra.mxu0 0.0
    %88 = vmatprep.subr.mxu0 0.0
    %89 = vmatpush2.msra.mxu0 0.0
    %90 = vmatprep.subr.mxu0 0.0
    %91 = vmatpush2.msra.mxu0 0.0
    %92 = vmatprep.subr.mxu0 0.0
    %93 = vmatpush2.msra.mxu0 0.0
    %94 = vmatprep.subr.mxu0 0.0
    %95 = vmatpush2.msra.mxu0 0.0
    %96 = vmatprep.subr.mxu0 0.0
    %97 = vmatpush2.msra.mxu0 0.0
    %98 = vmatprep.subr.mxu0 0.0
    %99 = vmatpush2.msra.mxu0 0.0
    %100 = vmatprep.mubr.f32.mxu0 0.0
    %101 = vmatmul.mubr.f32.gmra.mxu0 %v31
    %v102 = vpop.f32.mrf.mxu0
    %v103 = vadd.f32 0.0, %v102
    %v104 = vpop.f32.mrf.mxu0
    %105 = vmatprep.mubr.f32.mxu0 0.0
    %106 = vmatmul.mubr.f32.gmra.mxu0 %v34
    %v107 = vpop.f32.mrf.mxu0
    %v108 = vadd.f32 0.0, %v107
    %v109 = vpop.f32.mrf.mxu0
    %110 = vdwg.mxu0
    %v111 = vld [vmem:[%s2] sm:$0xff]
    %v112 = vld [vmem:[%s2 + $0x8] sm:$0xff]
    %115 = vrot.lane.b32.xlu0 %v103, 96
    %v116 = vpop.permute.xlu0 %115
    %117 = vrot.lane.b32.xlu0 %v108, 96
    %v118 = vpop.permute.xlu0 %117
    %vm119 = vcmask 64512
    %v120 = vsel %vm119, %v103, 0
    %v122 = vsel %vm119, %v108, 0
    %v124 = vsel %vm119, %v116, 0
    %v126 = vsel %vm119, %v118, 0
    %128 = vmatprep.subr.mxu0 0.0
    %129 = vmatpush1.xpose.msra.mxu0 0.0
    %130 = vmatprep.subr.mxu0 0.0
    %131 = vmatpush1.xpose.msra.mxu0 0.0
    %132 = vmatprep.subr.mxu0 0.0
    %133 = vmatpush1.xpose.msra.mxu0 0.0
    %134 = vmatprep.subr.mxu0 0.0
    %135 = vmatpush1.xpose.msra.mxu0 0.0
    %136 = vmatprep.subr.mxu0 0.0
    %137 = vmatpush1.xpose.msra.mxu0 0.0
    %138 = vmatprep.subr.mxu0 0.0
    %139 = vmatpush1.xpose.msra.mxu0 0.0
    %140 = vmatprep.subr.mxu0 0.0
    %141 = vmatpush1.xpose.msra.mxu0 0.0
    %142 = vmatprep.subr.mxu0 0.0
    %143 = vmatpush1.xpose.msra.mxu0 0.0
    %144 = vmatprep.subr.mxu0 0.0
    %145 = vmatpush1.xpose.msra.mxu0 0.0
    %146 = vmatprep.subr.mxu0 0.0
    %147 = vmatpush1.xpose.msra.mxu0 0.0
    %148 = vmatprep.subr.mxu0 0.0
    %149 = vmatpush1.xpose.msra.mxu0 0.0
    %150 = vmatprep.subr.mxu0 0.0
    %151 = vmatpush1.xpose.msra.mxu0 0.0
    %152 = vmatprep.subr.mxu0 0.0
    %153 = vmatpush1.xpose.msra.mxu0 0.0
    %154 = vmatprep.subr.mxu0 0.0
    %155 = vmatpush1.xpose.msra.mxu0 0.0
    %156 = vmatprep.subr.mxu0 0.0
    %157 = vmatpush1.xpose.msra.mxu0 %v126
    %158 = vmatprep.subr.mxu0 0.0
    %159 = vmatpush1.xpose.msra.mxu0 %v124
    %160 = vmatprep.subr.mxu0 0.0
    %161 = vmatpush2.xpose.msra.mxu0 0.0
    %162 = vmatprep.subr.mxu0 0.0
    %163 = vmatpush2.xpose.msra.mxu0 0.0
    %164 = vmatprep.subr.mxu0 0.0
    %165 = vmatpush2.xpose.msra.mxu0 0.0
    %166 = vmatprep.subr.mxu0 0.0
    %167 = vmatpush2.xpose.msra.mxu0 0.0
    %168 = vmatprep.subr.mxu0 0.0
    %169 = vmatpush2.xpose.msra.mxu0 0.0
    %170 = vmatprep.subr.mxu0 0.0
    %171 = vmatpush2.xpose.msra.mxu0 0.0
    %172 = vmatprep.subr.mxu0 0.0
    %173 = vmatpush2.xpose.msra.mxu0 0.0
    %174 = vmatprep.subr.mxu0 0.0
    %175 = vmatpush2.xpose.msra.mxu0 0.0
    %176 = vmatprep.subr.mxu0 0.0
    %177 = vmatpush2.xpose.msra.mxu0 0.0
    %178 = vmatprep.subr.mxu0 0.0
    %179 = vmatpush2.xpose.msra.mxu0 0.0
    %180 = vmatprep.subr.mxu0 0.0
    %181 = vmatpush2.xpose.msra.mxu0 0.0
    %182 = vmatprep.subr.mxu0 0.0
    %183 = vmatpush2.xpose.msra.mxu0 0.0
    %184 = vmatprep.subr.mxu0 0.0
    %185 = vmatpush2.xpose.msra.mxu0 0.0
    %186 = vmatprep.subr.mxu0 0.0
    %187 = vmatpush2.xpose.msra.mxu0 0.0
    %188 = vmatprep.subr.mxu0 0.0
    %189 = vmatpush2.xpose.msra.mxu0 0.0
    %190 = vmatprep.subr.mxu0 0.0
    %191 = vmatpush2.xpose.msra.mxu0 0.0
    %192 = vmatprep.mubr.f32.mxu0 0.0
    %193 = vmatmul.mubr.f32.gmra.mxu0 %v120
    %v194 = vpop.f32.mrf.mxu0
    %v195 = vadd.f32 %v111, %v194
    %v196 = vpop.f32.mrf.mxu0
    %197 = vmatprep.mubr.f32.mxu0 0.0
    %198 = vmatmul.mubr.f32.gmra.mxu0 %v122
    %v199 = vpop.f32.mrf.mxu0
    %v200 = vadd.f32 %v112, %v199
    %v201 = vpop.f32.mrf.mxu0
    %202 = vdwg.mxu0
    %vm203 = vcmask 130048
    %v204 = vsel %vm203, %v195, -inf
    %205 = vmax.xlane.f32.xlu0 %v204
    %v206 = vpop.xlane.xlu0 %205
    %v207 = vsel %vm203, %v200, -inf
    %208 = vmax.xlane.f32.xlu0 %v207
    %v209 = vpop.xlane.xlu0 %208
    %v210 = vsub.f32 %v195, %v206
    %v211 = vsub.f32 %v200, %v209
    %v212 = vmul.f32 %v210, 1.442695
    %v213 = vpow.pop %v212
    %v214 = vmul.f32 %v211, 1.442695
    %v215 = vpow.pop %v214
    %v216 = vsel %vm203, %v213, 0.0
    %217 = vadd.xlane.f32.xlu0 %v216
    %v218 = vpop.xlane.xlu0 %217
    %v219 = vsel %vm203, %v215, 0.0
    %220 = vadd.xlane.f32.xlu0 %v219
    %v221 = vpop.xlane.xlu0 %220
    %222 = vrot.lane.b32.xlu0 %v103, 64
    %v223 = vpop.permute.xlu0 %222
    %224 = vrot.lane.b32.xlu0 %v108, 64
    %v225 = vpop.permute.xlu0 %224
    %v229 = vsel %vm203, %v213, 0
    %v232 = vsel %vm203, %v215, 0
    %234 = vmatprep.subr.mxu0 0.0
    %235 = vmatpush1.msra.mxu0 0.0
    %236 = vmatprep.subr.mxu0 0.0
    %237 = vmatpush1.msra.mxu0 0.0
    %238 = vmatprep.subr.mxu0 0.0
    %239 = vmatpush1.msra.mxu0 0.0
    %240 = vmatprep.subr.mxu0 0.0
    %241 = vmatpush1.msra.mxu0 0.0
    %242 = vmatprep.subr.mxu0 0.0
    %243 = vmatpush1.msra.mxu0 0.0
    %244 = vmatprep.subr.mxu0 0.0
    %245 = vmatpush1.msra.mxu0 0.0
    %246 = vmatprep.subr.mxu0 0.0
    %247 = vmatpush1.msra.mxu0 0.0
    %248 = vmatprep.subr.mxu0 0.0
    %249 = vmatpush1.msra.mxu0 0.0
    %250 = vmatprep.subr.mxu0 0.0
    %251 = vmatpush1.msra.mxu0 0.0
    %252 = vmatprep.subr.mxu0 0.0
    %253 = vmatpush1.msra.mxu0 0.0
    %254 = vmatprep.subr.mxu0 0.0
    %255 = vmatpush1.msra.mxu0 0.0
    %256 = vmatprep.subr.mxu0 0.0
    %257 = vmatpush1.msra.mxu0 0.0
    %258 = vmatprep.subr.mxu0 0.0
    %259 = vmatpush1.msra.mxu0 0.0
    %260 = vmatprep.subr.mxu0 0.0
    %261 = vmatpush1.msra.mxu0 0.0
    %262 = vmatprep.subr.mxu0 0.0
    %263 = vmatpush1.msra.mxu0 %v225
    %264 = vmatprep.subr.mxu0 0.0
    %265 = vmatpush1.msra.mxu0 %v223
    %266 = vmatprep.subr.mxu0 0.0
    %267 = vmatpush2.msra.mxu0 0.0
    %268 = vmatprep.subr.mxu0 0.0
    %269 = vmatpush2.msra.mxu0 0.0
    %270 = vmatprep.subr.mxu0 0.0
    %271 = vmatpush2.msra.mxu0 0.0
    %272 = vmatprep.subr.mxu0 0.0
    %273 = vmatpush2.msra.mxu0 0.0
    %274 = vmatprep.subr.mxu0 0.0
    %275 = vmatpush2.msra.mxu0 0.0
    %276 = vmatprep.subr.mxu0 0.0
    %277 = vmatpush2.msra.mxu0 0.0
    %278 = vmatprep.subr.mxu0 0.0
    %279 = vmatpush2.msra.mxu0 0.0
    %280 = vmatprep.subr.mxu0 0.0
    %281 = vmatpush2.msra.mxu0 0.0
    %282 = vmatprep.subr.mxu0 0.0
    %283 = vmatpush2.msra.mxu0 0.0
    %284 = vmatprep.subr.mxu0 0.0
    %285 = vmatpush2.msra.mxu0 0.0
    %286 = vmatprep.subr.mxu0 0.0
    %287 = vmatpush2.msra.mxu0 0.0
    %288 = vmatprep.subr.mxu0 0.0
    %289 = vmatpush2.msra.mxu0 0.0
    %290 = vmatprep.subr.mxu0 0.0
    %291 = vmatpush2.msra.mxu0 0.0
    %292 = vmatprep.subr.mxu0 0.0
    %293 = vmatpush2.msra.mxu0 0.0
    %294 = vmatprep.subr.mxu0 0.0
    %295 = vmatpush2.msra.mxu0 0.0
    %296 = vmatprep.subr.mxu0 0.0
    %297 = vmatpush2.msra.mxu0 0.0
    %298 = vmatprep.mubr.f32.mxu0 0.0
    %299 = vmatmul.mubr.f32.gmra.mxu0 %v229
    %v300 = vpop.f32.mrf.mxu0
    %v301 = vadd.f32 0.0, %v300
    %v302 = vpop.f32.mrf.mxu0
    %303 = vmatprep.mubr.f32.mxu0 0.0
    %304 = vmatmul.mubr.f32.gmra.mxu0 %v232
    %v305 = vpop.f32.mrf.mxu0
    %v306 = vadd.f32 0.0, %v305
    %v307 = vpop.f32.mrf.mxu0
    %308 = vdwg.mxu0
    %v309 = vrcp.pop %v218
    %v310 = vrcp.pop %v221
    %v311 = vmul.f32 %v301, %v309
    %v312 = vmul.f32 %v306, %v310
    %s313 = scalar_lea.vmem %s2, 16
    %v314 = vld [vmem:[%s313] sm:$0xff]
    %v315 = vld [vmem:[%s313 + $0x8] sm:$0xff]
    %316 = vrot.lane.b32.xlu0 %v103, 120
    %v317 = vpop.permute.xlu0 %316
    %318 = vrot.lane.b32.xlu0 %v108, 120
    %v319 = vpop.permute.xlu0 %318
    %320 = vrot.lane.b32.xlu0 %v103, 88
    %v321 = vpop.permute.xlu0 %320
    %322 = vrot.lane.b32.xlu0 %v108, 88
    %v323 = vpop.permute.xlu0 %322
    %v324 = vsel %vm119, %v317, 0
    %v326 = vsel %vm119, %v319, 0
    %v328 = vsel %vm119, %v321, 0
    %v330 = vsel %vm119, %v323, 0
    %332 = vmatprep.subr.mxu0 0.0
    %333 = vmatpush1.xpose.msra.mxu0 0.0
    %334 = vmatprep.subr.mxu0 0.0
    %335 = vmatpush1.xpose.msra.mxu0 0.0
    %336 = vmatprep.subr.mxu0 0.0
    %337 = vmatpush1.xpose.msra.mxu0 0.0
    %338 = vmatprep.subr.mxu0 0.0
    %339 = vmatpush1.xpose.msra.mxu0 0.0
    %340 = vmatprep.subr.mxu0 0.0
    %341 = vmatpush1.xpose.msra.mxu0 0.0
    %342 = vmatprep.subr.mxu0 0.0
    %343 = vmatpush1.xpose.msra.mxu0 0.0
    %344 = vmatprep.subr.mxu0 0.0
    %345 = vmatpush1.xpose.msra.mxu0 0.0
    %346 = vmatprep.subr.mxu0 0.0
    %347 = vmatpush1.xpose.msra.mxu0 0.0
    %348 = vmatprep.subr.mxu0 0.0
    %349 = vmatpush1.xpose.msra.mxu0 0.0
    %350 = vmatprep.subr.mxu0 0.0
    %351 = vmatpush1.xpose.msra.mxu0 0.0
    %352 = vmatprep.subr.mxu0 0.0
    %353 = vmatpush1.xpose.msra.mxu0 0.0
    %354 = vmatprep.subr.mxu0 0.0
    %355 = vmatpush1.xpose.msra.mxu0 0.0
    %356 = vmatprep.subr.mxu0 0.0
    %357 = vmatpush1.xpose.msra.mxu0 0.0
    %358 = vmatprep.subr.mxu0 0.0
    %359 = vmatpush1.xpose.msra.mxu0 0.0
    %360 = vmatprep.subr.mxu0 0.0
    %361 = vmatpush1.xpose.msra.mxu0 %v330
    %362 = vmatprep.subr.mxu0 0.0
    %363 = vmatpush1.xpose.msra.mxu0 %v328
    %364 = vmatprep.subr.mxu0 0.0
    %365 = vmatpush2.xpose.msra.mxu0 0.0
    %366 = vmatprep.subr.mxu0 0.0
    %367 = vmatpush2.xpose.msra.mxu0 0.0
    %368 = vmatprep.subr.mxu0 0.0
    %369 = vmatpush2.xpose.msra.mxu0 0.0
    %370 = vmatprep.subr.mxu0 0.0
    %371 = vmatpush2.xpose.msra.mxu0 0.0
    %372 = vmatprep.subr.mxu0 0.0
    %373 = vmatpush2.xpose.msra.mxu0 0.0
    %374 = vmatprep.subr.mxu0 0.0
    %375 = vmatpush2.xpose.msra.mxu0 0.0
    %376 = vmatprep.subr.mxu0 0.0
    %377 = vmatpush2.xpose.msra.mxu0 0.0
    %378 = vmatprep.subr.mxu0 0.0
    %379 = vmatpush2.xpose.msra.mxu0 0.0
    %380 = vmatprep.subr.mxu0 0.0
    %381 = vmatpush2.xpose.msra.mxu0 0.0
    %382 = vmatprep.subr.mxu0 0.0
    %383 = vmatpush2.xpose.msra.mxu0 0.0
    %384 = vmatprep.subr.mxu0 0.0
    %385 = vmatpush2.xpose.msra.mxu0 0.0
    %386 = vmatprep.subr.mxu0 0.0
    %387 = vmatpush2.xpose.msra.mxu0 0.0
    %388 = vmatprep.subr.mxu0 0.0
    %389 = vmatpush2.xpose.msra.mxu0 0.0
    %390 = vmatprep.subr.mxu0 0.0
    %391 = vmatpush2.xpose.msra.mxu0 0.0
    %392 = vmatprep.subr.mxu0 0.0
    %393 = vmatpush2.xpose.msra.mxu0 0.0
    %394 = vmatprep.subr.mxu0 0.0
    %395 = vmatpush2.xpose.msra.mxu0 0.0
    %396 = vmatprep.mubr.f32.mxu0 0.0
    %397 = vmatmul.mubr.f32.gmra.mxu0 %v324
    %v398 = vpop.f32.mrf.mxu0
    %v399 = vadd.f32 %v314, %v398
    %v400 = vpop.f32.mrf.mxu0
    %401 = vmatprep.mubr.f32.mxu0 0.0
    %402 = vmatmul.mubr.f32.gmra.mxu0 %v326
    %v403 = vpop.f32.mrf.mxu0
    %v404 = vadd.f32 %v315, %v403
    %v405 = vpop.f32.mrf.mxu0
    %406 = vdwg.mxu0
    %v407 = vsel %vm203, %v399, -inf
    %408 = vmax.xlane.f32.xlu0 %v407
    %v409 = vpop.xlane.xlu0 %408
    %v410 = vsel %vm203, %v404, -inf
    %411 = vmax.xlane.f32.xlu0 %v410
    %v412 = vpop.xlane.xlu0 %411
    %v413 = vsub.f32 %v399, %v409
    %v414 = vsub.f32 %v404, %v412
    %v415 = vmul.f32 %v413, 1.442695
    %v416 = vpow.pop %v415
    %v417 = vmul.f32 %v414, 1.442695
    %v418 = vpow.pop %v417
    %v419 = vsel %vm203, %v416, 0.0
    %420 = vadd.xlane.f32.xlu0 %v419
    %v421 = vpop.xlane.xlu0 %420
    %v422 = vsel %vm203, %v418, 0.0
    %423 = vadd.xlane.f32.xlu0 %v422
    %v424 = vpop.xlane.xlu0 %423
    %425 = vrot.lane.b32.xlu0 %v103, 56
    %v426 = vpop.permute.xlu0 %425
    %427 = vrot.lane.b32.xlu0 %v108, 56
    %v428 = vpop.permute.xlu0 %427
    %v432 = vsel %vm203, %v416, 0
    %v435 = vsel %vm203, %v418, 0
    %437 = vmatprep.subr.mxu0 0.0
    %438 = vmatpush1.msra.mxu0 0.0
    %439 = vmatprep.subr.mxu0 0.0
    %440 = vmatpush1.msra.mxu0 0.0
    %441 = vmatprep.subr.mxu0 0.0
    %442 = vmatpush1.msra.mxu0 0.0
    %443 = vmatprep.subr.mxu0 0.0
    %444 = vmatpush1.msra.mxu0 0.0
    %445 = vmatprep.subr.mxu0 0.0
    %446 = vmatpush1.msra.mxu0 0.0
    %447 = vmatprep.subr.mxu0 0.0
    %448 = vmatpush1.msra.mxu0 0.0
    %449 = vmatprep.subr.mxu0 0.0
    %450 = vmatpush1.msra.mxu0 0.0
    %451 = vmatprep.subr.mxu0 0.0
    %452 = vmatpush1.msra.mxu0 0.0
    %453 = vmatprep.subr.mxu0 0.0
    %454 = vmatpush1.msra.mxu0 0.0
    %455 = vmatprep.subr.mxu0 0.0
    %456 = vmatpush1.msra.mxu0 0.0
    %457 = vmatprep.subr.mxu0 0.0
    %458 = vmatpush1.msra.mxu0 0.0
    %459 = vmatprep.subr.mxu0 0.0
    %460 = vmatpush1.msra.mxu0 0.0
    %461 = vmatprep.subr.mxu0 0.0
    %462 = vmatpush1.msra.mxu0 0.0
    %463 = vmatprep.subr.mxu0 0.0
    %464 = vmatpush1.msra.mxu0 0.0
    %465 = vmatprep.subr.mxu0 0.0
    %466 = vmatpush1.msra.mxu0 %v428
    %467 = vmatprep.subr.mxu0 0.0
    %468 = vmatpush1.msra.mxu0 %v426
    %469 = vmatprep.subr.mxu0 0.0
    %470 = vmatpush2.msra.mxu0 0.0
    %471 = vmatprep.subr.mxu0 0.0
    %472 = vmatpush2.msra.mxu0 0.0
    %473 = vmatprep.subr.mxu0 0.0
    %474 = vmatpush2.msra.mxu0 0.0
    %475 = vmatprep.subr.mxu0 0.0
    %476 = vmatpush2.msra.mxu0 0.0
    %477 = vmatprep.subr.mxu0 0.0
    %478 = vmatpush2.msra.mxu0 0.0
    %479 = vmatprep.subr.mxu0 0.0
    %480 = vmatpush2.msra.mxu0 0.0
    %481 = vmatprep.subr.mxu0 0.0
    %482 = vmatpush2.msra.mxu0 0.0
    %483 = vmatprep.subr.mxu0 0.0
    %484 = vmatpush2.msra.mxu0 0.0
    %485 = vmatprep.subr.mxu0 0.0
    %486 = vmatpush2.msra.mxu0 0.0
    %487 = vmatprep.subr.mxu0 0.0
    %488 = vmatpush2.msra.mxu0 0.0
    %489 = vmatprep.subr.mxu0 0.0
    %490 = vmatpush2.msra.mxu0 0.0
    %491 = vmatprep.subr.mxu0 0.0
    %492 = vmatpush2.msra.mxu0 0.0
    %493 = vmatprep.subr.mxu0 0.0
    %494 = vmatpush2.msra.mxu0 0.0
    %495 = vmatprep.subr.mxu0 0.0
    %496 = vmatpush2.msra.mxu0 0.0
    %497 = vmatprep.subr.mxu0 0.0
    %498 = vmatpush2.msra.mxu0 0.0
    %499 = vmatprep.subr.mxu0 0.0
    %500 = vmatpush2.msra.mxu0 0.0
    %501 = vmatprep.mubr.f32.mxu0 0.0
    %502 = vmatmul.mubr.f32.gmra.mxu0 %v432
    %v503 = vpop.f32.mrf.mxu0
    %v504 = vadd.f32 0.0, %v503
    %v505 = vpop.f32.mrf.mxu0
    %506 = vmatprep.mubr.f32.mxu0 0.0
    %507 = vmatmul.mubr.f32.gmra.mxu0 %v435
    %v508 = vpop.f32.mrf.mxu0
    %v509 = vadd.f32 0.0, %v508
    %v510 = vpop.f32.mrf.mxu0
    %511 = vdwg.mxu0
    %v512 = vrcp.pop %v421
    %v513 = vrcp.pop %v424
    %v514 = vmul.f32 %v504, %v512
    %v515 = vmul.f32 %v509, %v513
    %s516 = scalar_lea.vmem %s2, 32
    %v517 = vld [vmem:[%s516] sm:$0xff]
    %v518 = vld [vmem:[%s516 + $0x8] sm:$0xff]
    %519 = vrot.lane.b32.xlu0 %v103, 112
    %v520 = vpop.permute.xlu0 %519
    %521 = vrot.lane.b32.xlu0 %v108, 112
    %v522 = vpop.permute.xlu0 %521
    %523 = vrot.lane.b32.xlu0 %v103, 80
    %v524 = vpop.permute.xlu0 %523
    %525 = vrot.lane.b32.xlu0 %v108, 80
    %v526 = vpop.permute.xlu0 %525
    %v527 = vsel %vm119, %v520, 0
    %v529 = vsel %vm119, %v522, 0
    %v531 = vsel %vm119, %v524, 0
    %v533 = vsel %vm119, %v526, 0
    %535 = vmatprep.subr.mxu0 0.0
    %536 = vmatpush1.xpose.msra.mxu0 0.0
    %537 = vmatprep.subr.mxu0 0.0
    %538 = vmatpush1.xpose.msra.mxu0 0.0
    %539 = vmatprep.subr.mxu0 0.0
    %540 = vmatpush1.xpose.msra.mxu0 0.0
    %541 = vmatprep.subr.mxu0 0.0
    %542 = vmatpush1.xpose.msra.mxu0 0.0
    %543 = vmatprep.subr.mxu0 0.0
    %544 = vmatpush1.xpose.msra.mxu0 0.0
    %545 = vmatprep.subr.mxu0 0.0
    %546 = vmatpush1.xpose.msra.mxu0 0.0
    %547 = vmatprep.subr.mxu0 0.0
    %548 = vmatpush1.xpose.msra.mxu0 0.0
    %549 = vmatprep.subr.mxu0 0.0
    %550 = vmatpush1.xpose.msra.mxu0 0.0
    %551 = vmatprep.subr.mxu0 0.0
    %552 = vmatpush1.xpose.msra.mxu0 0.0
    %553 = vmatprep.subr.mxu0 0.0
    %554 = vmatpush1.xpose.msra.mxu0 0.0
    %555 = vmatprep.subr.mxu0 0.0
    %556 = vmatpush1.xpose.msra.mxu0 0.0
    %557 = vmatprep.subr.mxu0 0.0
    %558 = vmatpush1.xpose.msra.mxu0 0.0
    %559 = vmatprep.subr.mxu0 0.0
    %560 = vmatpush1.xpose.msra.mxu0 0.0
    %561 = vmatprep.subr.mxu0 0.0
    %562 = vmatpush1.xpose.msra.mxu0 0.0
    %563 = vmatprep.subr.mxu0 0.0
    %564 = vmatpush1.xpose.msra.mxu0 %v533
    %565 = vmatprep.subr.mxu0 0.0
    %566 = vmatpush1.xpose.msra.mxu0 %v531
    %567 = vmatprep.subr.mxu0 0.0
    %568 = vmatpush2.xpose.msra.mxu0 0.0
    %569 = vmatprep.subr.mxu0 0.0
    %570 = vmatpush2.xpose.msra.mxu0 0.0
    %571 = vmatprep.subr.mxu0 0.0
    %572 = vmatpush2.xpose.msra.mxu0 0.0
    %573 = vmatprep.subr.mxu0 0.0
    %574 = vmatpush2.xpose.msra.mxu0 0.0
    %575 = vmatprep.subr.mxu0 0.0
    %576 = vmatpush2.xpose.msra.mxu0 0.0
    %577 = vmatprep.subr.mxu0 0.0
    %578 = vmatpush2.xpose.msra.mxu0 0.0
    %579 = vmatprep.subr.mxu0 0.0
    %580 = vmatpush2.xpose.msra.mxu0 0.0
    %581 = vmatprep.subr.mxu0 0.0
    %582 = vmatpush2.xpose.msra.mxu0 0.0
    %583 = vmatprep.subr.mxu0 0.0
    %584 = vmatpush2.xpose.msra.mxu0 0.0
    %585 = vmatprep.subr.mxu0 0.0
    %586 = vmatpush2.xpose.msra.mxu0 0.0
    %587 = vmatprep.subr.mxu0 0.0
    %588 = vmatpush2.xpose.msra.mxu0 0.0
    %589 = vmatprep.subr.mxu0 0.0
    %590 = vmatpush2.xpose.msra.mxu0 0.0
    %591 = vmatprep.subr.mxu0 0.0
    %592 = vmatpush2.xpose.msra.mxu0 0.0
    %593 = vmatprep.subr.mxu0 0.0
    %594 = vmatpush2.xpose.msra.mxu0 0.0
    %595 = vmatprep.subr.mxu0 0.0
    %596 = vmatpush2.xpose.msra.mxu0 0.0
    %597 = vmatprep.subr.mxu0 0.0
    %598 = vmatpush2.xpose.msra.mxu0 0.0
    %599 = vmatprep.mubr.f32.mxu0 0.0
    %600 = vmatmul.mubr.f32.gmra.mxu0 %v527
    %v601 = vpop.f32.mrf.mxu0
    %v602 = vadd.f32 %v517, %v601
    %v603 = vpop.f32.mrf.mxu0
    %604 = vmatprep.mubr.f32.mxu0 0.0
    %605 = vmatmul.mubr.f32.gmra.mxu0 %v529
    %v606 = vpop.f32.mrf.mxu0
    %v607 = vadd.f32 %v518, %v606
    %v608 = vpop.f32.mrf.mxu0
    %609 = vdwg.mxu0
    %v610 = vsel %vm203, %v602, -inf
    %611 = vmax.xlane.f32.xlu0 %v610
    %v612 = vpop.xlane.xlu0 %611
    %v613 = vsel %vm203, %v607, -inf
    %614 = vmax.xlane.f32.xlu0 %v613
    %v615 = vpop.xlane.xlu0 %614
    %v616 = vsub.f32 %v602, %v612
    %v617 = vsub.f32 %v607, %v615
    %v618 = vmul.f32 %v616, 1.442695
    %v619 = vpow.pop %v618
    %v620 = vmul.f32 %v617, 1.442695
    %v621 = vpow.pop %v620
    %v622 = vsel %vm203, %v619, 0.0
    %623 = vadd.xlane.f32.xlu0 %v622
    %v624 = vpop.xlane.xlu0 %623
    %v625 = vsel %vm203, %v621, 0.0
    %626 = vadd.xlane.f32.xlu0 %v625
    %v627 = vpop.xlane.xlu0 %626
    %628 = vrot.lane.b32.xlu0 %v103, 48
    %v629 = vpop.permute.xlu0 %628
    %630 = vrot.lane.b32.xlu0 %v108, 48
    %v631 = vpop.permute.xlu0 %630
    %v635 = vsel %vm203, %v619, 0
    %v638 = vsel %vm203, %v621, 0
    %640 = vmatprep.subr.mxu0 0.0
    %641 = vmatpush1.msra.mxu0 0.0
    %642 = vmatprep.subr.mxu0 0.0
    %643 = vmatpush1.msra.mxu0 0.0
    %644 = vmatprep.subr.mxu0 0.0
    %645 = vmatpush1.msra.mxu0 0.0
    %646 = vmatprep.subr.mxu0 0.0
    %647 = vmatpush1.msra.mxu0 0.0
    %648 = vmatprep.subr.mxu0 0.0
    %649 = vmatpush1.msra.mxu0 0.0
    %650 = vmatprep.subr.mxu0 0.0
    %651 = vmatpush1.msra.mxu0 0.0
    %652 = vmatprep.subr.mxu0 0.0
    %653 = vmatpush1.msra.mxu0 0.0
    %654 = vmatprep.subr.mxu0 0.0
    %655 = vmatpush1.msra.mxu0 0.0
    %656 = vmatprep.subr.mxu0 0.0
    %657 = vmatpush1.msra.mxu0 0.0
    %658 = vmatprep.subr.mxu0 0.0
    %659 = vmatpush1.msra.mxu0 0.0
    %660 = vmatprep.subr.mxu0 0.0
    %661 = vmatpush1.msra.mxu0 0.0
    %662 = vmatprep.subr.mxu0 0.0
    %663 = vmatpush1.msra.mxu0 0.0
    %664 = vmatprep.subr.mxu0 0.0
    %665 = vmatpush1.msra.mxu0 0.0
    %666 = vmatprep.subr.mxu0 0.0
    %667 = vmatpush1.msra.mxu0 0.0
    %668 = vmatprep.subr.mxu0 0.0
    %669 = vmatpush1.msra.mxu0 %v631
    %670 = vmatprep.subr.mxu0 0.0
    %671 = vmatpush1.msra.mxu0 %v629
    %672 = vmatprep.subr.mxu0 0.0
    %673 = vmatpush2.msra.mxu0 0.0
    %674 = vmatprep.subr.mxu0 0.0
    %675 = vmatpush2.msra.mxu0 0.0
    %676 = vmatprep.subr.mxu0 0.0
    %677 = vmatpush2.msra.mxu0 0.0
    %678 = vmatprep.subr.mxu0 0.0
    %679 = vmatpush2.msra.mxu0 0.0
    %680 = vmatprep.subr.mxu0 0.0
    %681 = vmatpush2.msra.mxu0 0.0
    %682 = vmatprep.subr.mxu0 0.0
    %683 = vmatpush2.msra.mxu0 0.0
    %684 = vmatprep.subr.mxu0 0.0
    %685 = vmatpush2.msra.mxu0 0.0
    %686 = vmatprep.subr.mxu0 0.0
    %687 = vmatpush2.msra.mxu0 0.0
    %688 = vmatprep.subr.mxu0 0.0
    %689 = vmatpush2.msra.mxu0 0.0
    %690 = vmatprep.subr.mxu0 0.0
    %691 = vmatpush2.msra.mxu0 0.0
    %692 = vmatprep.subr.mxu0 0.0
    %693 = vmatpush2.msra.mxu0 0.0
    %694 = vmatprep.subr.mxu0 0.0
    %695 = vmatpush2.msra.mxu0 0.0
    %696 = vmatprep.subr.mxu0 0.0
    %697 = vmatpush2.msra.mxu0 0.0
    %698 = vmatprep.subr.mxu0 0.0
    %699 = vmatpush2.msra.mxu0 0.0
    %700 = vmatprep.subr.mxu0 0.0
    %701 = vmatpush2.msra.mxu0 0.0
    %702 = vmatprep.subr.mxu0 0.0
    %703 = vmatpush2.msra.mxu0 0.0
    %704 = vmatprep.mubr.f32.mxu0 0.0
    %705 = vmatmul.mubr.f32.gmra.mxu0 %v635
    %v706 = vpop.f32.mrf.mxu0
    %v707 = vadd.f32 0.0, %v706
    %v708 = vpop.f32.mrf.mxu0
    %709 = vmatprep.mubr.f32.mxu0 0.0
    %710 = vmatmul.mubr.f32.gmra.mxu0 %v638
    %v711 = vpop.f32.mrf.mxu0
    %v712 = vadd.f32 0.0, %v711
    %v713 = vpop.f32.mrf.mxu0
    %714 = vdwg.mxu0
    %v715 = vrcp.pop %v624
    %v716 = vrcp.pop %v627
    %v717 = vmul.f32 %v707, %v715
    %v718 = vmul.f32 %v712, %v716
    %s719 = scalar_lea.vmem %s2, 48
    %v720 = vld [vmem:[%s719] sm:$0xff]
    %v721 = vld [vmem:[%s719 + $0x8] sm:$0xff]
    %722 = vrot.lane.b32.xlu0 %v103, 104
    %v723 = vpop.permute.xlu0 %722
    %724 = vrot.lane.b32.xlu0 %v108, 104
    %v725 = vpop.permute.xlu0 %724
    %726 = vrot.lane.b32.xlu0 %v103, 72
    %v727 = vpop.permute.xlu0 %726
    %728 = vrot.lane.b32.xlu0 %v108, 72
    %v729 = vpop.permute.xlu0 %728
    %v730 = vsel %vm119, %v723, 0
    %v732 = vsel %vm119, %v725, 0
    %v734 = vsel %vm119, %v727, 0
    %v736 = vsel %vm119, %v729, 0
    %738 = vmatprep.subr.mxu0 0.0
    %739 = vmatpush1.xpose.msra.mxu0 0.0
    %740 = vmatprep.subr.mxu0 0.0
    %741 = vmatpush1.xpose.msra.mxu0 0.0
    %742 = vmatprep.subr.mxu0 0.0
    %743 = vmatpush1.xpose.msra.mxu0 0.0
    %744 = vmatprep.subr.mxu0 0.0
    %745 = vmatpush1.xpose.msra.mxu0 0.0
    %746 = vmatprep.subr.mxu0 0.0
    %747 = vmatpush1.xpose.msra.mxu0 0.0
    %748 = vmatprep.subr.mxu0 0.0
    %749 = vmatpush1.xpose.msra.mxu0 0.0
    %750 = vmatprep.subr.mxu0 0.0
    %751 = vmatpush1.xpose.msra.mxu0 0.0
    %752 = vmatprep.subr.mxu0 0.0
    %753 = vmatpush1.xpose.msra.mxu0 0.0
    %754 = vmatprep.subr.mxu0 0.0
    %755 = vmatpush1.xpose.msra.mxu0 0.0
    %756 = vmatprep.subr.mxu0 0.0
    %757 = vmatpush1.xpose.msra.mxu0 0.0
    %758 = vmatprep.subr.mxu0 0.0
    %759 = vmatpush1.xpose.msra.mxu0 0.0
    %760 = vmatprep.subr.mxu0 0.0
    %761 = vmatpush1.xpose.msra.mxu0 0.0
    %762 = vmatprep.subr.mxu0 0.0
    %763 = vmatpush1.xpose.msra.mxu0 0.0
    %764 = vmatprep.subr.mxu0 0.0
    %765 = vmatpush1.xpose.msra.mxu0 0.0
    %766 = vmatprep.subr.mxu0 0.0
    %767 = vmatpush1.xpose.msra.mxu0 %v736
    %768 = vmatprep.subr.mxu0 0.0
    %769 = vmatpush1.xpose.msra.mxu0 %v734
    %770 = vmatprep.subr.mxu0 0.0
    %771 = vmatpush2.xpose.msra.mxu0 0.0
    %772 = vmatprep.subr.mxu0 0.0
    %773 = vmatpush2.xpose.msra.mxu0 0.0
    %774 = vmatprep.subr.mxu0 0.0
    %775 = vmatpush2.xpose.msra.mxu0 0.0
    %776 = vmatprep.subr.mxu0 0.0
    %777 = vmatpush2.xpose.msra.mxu0 0.0
    %778 = vmatprep.subr.mxu0 0.0
    %779 = vmatpush2.xpose.msra.mxu0 0.0
    %780 = vmatprep.subr.mxu0 0.0
    %781 = vmatpush2.xpose.msra.mxu0 0.0
    %782 = vmatprep.subr.mxu0 0.0
    %783 = vmatpush2.xpose.msra.mxu0 0.0
    %784 = vmatprep.subr.mxu0 0.0
    %785 = vmatpush2.xpose.msra.mxu0 0.0
    %786 = vmatprep.subr.mxu0 0.0
    %787 = vmatpush2.xpose.msra.mxu0 0.0
    %788 = vmatprep.subr.mxu0 0.0
    %789 = vmatpush2.xpose.msra.mxu0 0.0
    %790 = vmatprep.subr.mxu0 0.0
    %791 = vmatpush2.xpose.msra.mxu0 0.0
    %792 = vmatprep.subr.mxu0 0.0
    %793 = vmatpush2.xpose.msra.mxu0 0.0
    %794 = vmatprep.subr.mxu0 0.0
    %795 = vmatpush2.xpose.msra.mxu0 0.0
    %796 = vmatprep.subr.mxu0 0.0
    %797 = vmatpush2.xpose.msra.mxu0 0.0
    %798 = vmatprep.subr.mxu0 0.0
    %799 = vmatpush2.xpose.msra.mxu0 0.0
    %800 = vmatprep.subr.mxu0 0.0
    %801 = vmatpush2.xpose.msra.mxu0 0.0
    %802 = vmatprep.mubr.f32.mxu0 0.0
    %803 = vmatmul.mubr.f32.gmra.mxu0 %v730
    %v804 = vpop.f32.mrf.mxu0
    %v805 = vadd.f32 %v720, %v804
    %v806 = vpop.f32.mrf.mxu0
    %807 = vmatprep.mubr.f32.mxu0 0.0
    %808 = vmatmul.mubr.f32.gmra.mxu0 %v732
    %v809 = vpop.f32.mrf.mxu0
    %v810 = vadd.f32 %v721, %v809
    %v811 = vpop.f32.mrf.mxu0
    %812 = vdwg.mxu0
    %v813 = vsel %vm203, %v805, -inf
    %814 = vmax.xlane.f32.xlu0 %v813
    %v815 = vpop.xlane.xlu0 %814
    %v816 = vsel %vm203, %v810, -inf
    %817 = vmax.xlane.f32.xlu0 %v816
    %v818 = vpop.xlane.xlu0 %817
    %v819 = vsub.f32 %v805, %v815
    %v820 = vsub.f32 %v810, %v818
    %v821 = vmul.f32 %v819, 1.442695
    %v822 = vpow.pop %v821
    %v823 = vmul.f32 %v820, 1.442695
    %v824 = vpow.pop %v823
    %v825 = vsel %vm203, %v822, 0.0
    %826 = vadd.xlane.f32.xlu0 %v825
    %v827 = vpop.xlane.xlu0 %826
    %v828 = vsel %vm203, %v824, 0.0
    %829 = vadd.xlane.f32.xlu0 %v828
    %v830 = vpop.xlane.xlu0 %829
    %831 = vrot.lane.b32.xlu0 %v103, 40
    %v832 = vpop.permute.xlu0 %831
    %833 = vrot.lane.b32.xlu0 %v108, 40
    %v834 = vpop.permute.xlu0 %833
    %v838 = vsel %vm203, %v822, 0
    %v841 = vsel %vm203, %v824, 0
    %843 = vmatprep.subr.mxu0 0.0
    %844 = vmatpush1.msra.mxu0 0.0
    %845 = vmatprep.subr.mxu0 0.0
    %846 = vmatpush1.msra.mxu0 0.0
    %847 = vmatprep.subr.mxu0 0.0
    %848 = vmatpush1.msra.mxu0 0.0
    %849 = vmatprep.subr.mxu0 0.0
    %850 = vmatpush1.msra.mxu0 0.0
    %851 = vmatprep.subr.mxu0 0.0
    %852 = vmatpush1.msra.mxu0 0.0
    %853 = vmatprep.subr.mxu0 0.0
    %854 = vmatpush1.msra.mxu0 0.0
    %855 = vmatprep.subr.mxu0 0.0
    %856 = vmatpush1.msra.mxu0 0.0
    %857 = vmatprep.subr.mxu0 0.0
    %858 = vmatpush1.msra.mxu0 0.0
    %859 = vmatprep.subr.mxu0 0.0
    %860 = vmatpush1.msra.mxu0 0.0
    %861 = vmatprep.subr.mxu0 0.0
    %862 = vmatpush1.msra.mxu0 0.0
    %863 = vmatprep.subr.mxu0 0.0
    %864 = vmatpush1.msra.mxu0 0.0
    %865 = vmatprep.subr.mxu0 0.0
    %866 = vmatpush1.msra.mxu0 0.0
    %867 = vmatprep.subr.mxu0 0.0
    %868 = vmatpush1.msra.mxu0 0.0
    %869 = vmatprep.subr.mxu0 0.0
    %870 = vmatpush1.msra.mxu0 0.0
    %871 = vmatprep.subr.mxu0 0.0
    %872 = vmatpush1.msra.mxu0 %v834
    %873 = vmatprep.subr.mxu0 0.0
    %874 = vmatpush1.msra.mxu0 %v832
    %875 = vmatprep.subr.mxu0 0.0
    %876 = vmatpush2.msra.mxu0 0.0
    %877 = vmatprep.subr.mxu0 0.0
    %878 = vmatpush2.msra.mxu0 0.0
    %879 = vmatprep.subr.mxu0 0.0
    %880 = vmatpush2.msra.mxu0 0.0
    %881 = vmatprep.subr.mxu0 0.0
    %882 = vmatpush2.msra.mxu0 0.0
    %883 = vmatprep.subr.mxu0 0.0
    %884 = vmatpush2.msra.mxu0 0.0
    %885 = vmatprep.subr.mxu0 0.0
    %886 = vmatpush2.msra.mxu0 0.0
    %887 = vmatprep.subr.mxu0 0.0
    %888 = vmatpush2.msra.mxu0 0.0
    %889 = vmatprep.subr.mxu0 0.0
    %890 = vmatpush2.msra.mxu0 0.0
    %891 = vmatprep.subr.mxu0 0.0
    %892 = vmatpush2.msra.mxu0 0.0
    %893 = vmatprep.subr.mxu0 0.0
    %894 = vmatpush2.msra.mxu0 0.0
    %895 = vmatprep.subr.mxu0 0.0
    %896 = vmatpush2.msra.mxu0 0.0
    %897 = vmatprep.subr.mxu0 0.0
    %898 = vmatpush2.msra.mxu0 0.0
    %899 = vmatprep.subr.mxu0 0.0
    %900 = vmatpush2.msra.mxu0 0.0
    %901 = vmatprep.subr.mxu0 0.0
    %902 = vmatpush2.msra.mxu0 0.0
    %903 = vmatprep.subr.mxu0 0.0
    %904 = vmatpush2.msra.mxu0 0.0
    %905 = vmatprep.subr.mxu0 0.0
    %906 = vmatpush2.msra.mxu0 0.0
    %907 = vmatprep.mubr.f32.mxu0 0.0
    %908 = vmatmul.mubr.f32.gmra.mxu0 %v838
    %v909 = vpop.f32.mrf.mxu0
    %v910 = vadd.f32 0.0, %v909
    %v911 = vpop.f32.mrf.mxu0
    %912 = vmatprep.mubr.f32.mxu0 0.0
    %913 = vmatmul.mubr.f32.gmra.mxu0 %v841
    %v914 = vpop.f32.mrf.mxu0
    %v915 = vadd.f32 0.0, %v914
    %v916 = vpop.f32.mrf.mxu0
    %917 = vdwg.mxu0
    %v918 = vrcp.pop %v827
    %v919 = vrcp.pop %v830
    %v920 = vmul.f32 %v910, %v918
    %v921 = vmul.f32 %v915, %v919
    %v922 = vld [vmem:[%s4 + $0x20] sm:$0xff]
    %v923 = vld [vmem:[%s4 + $0x28] sm:$0xff]
    %v924 = vld [vmem:[%s4 + $0x30] sm:$0xff]
    %v925 = vld [vmem:[%s4 + $0x38] sm:$0xff]
    %928 = vrot.lane.b32.xlu0 %v514, 8
    %v929 = vpop.permute.xlu0 %928
    %930 = vrot.lane.b32.xlu0 %v515, 8
    %v931 = vpop.permute.xlu0 %930
    %936 = vrot.lane.b32.xlu0 %v717, 16
    %v937 = vpop.permute.xlu0 %936
    %938 = vrot.lane.b32.xlu0 %v718, 16
    %v939 = vpop.permute.xlu0 %938
    %944 = vrot.lane.b32.xlu0 %v920, 24
    %v945 = vpop.permute.xlu0 %944
    %946 = vrot.lane.b32.xlu0 %v921, 24
    %v947 = vpop.permute.xlu0 %946
    %v950 = vsel %vm119, %v311, %v929
    %v951 = vsel %vm119, %v312, %v931
    %v952 = vsel %vm203, %v950, %v937
    %v953 = vsel %vm203, %v951, %v939
    %vm954 = vcmask 195584
    %v955 = vsel %vm954, %v952, %v945
    %v956 = vsel %vm954, %v953, %v947
    %v958 = vsel %vm29, %v955, 0
    %v961 = vsel %vm29, %v956, 0
    %963 = vmatprep.subr.mxu0 0.0
    %964 = vmatpush1.msra.mxu0 0.0
    %965 = vmatprep.subr.mxu0 0.0
    %966 = vmatpush1.msra.mxu0 0.0
    %967 = vmatprep.subr.mxu0 0.0
    %968 = vmatpush1.msra.mxu0 0.0
    %969 = vmatprep.subr.mxu0 0.0
    %970 = vmatpush1.msra.mxu0 0.0
    %971 = vmatprep.subr.mxu0 0.0
    %972 = vmatpush1.msra.mxu0 0.0
    %973 = vmatprep.subr.mxu0 0.0
    %974 = vmatpush1.msra.mxu0 0.0
    %975 = vmatprep.subr.mxu0 0.0
    %976 = vmatpush1.msra.mxu0 0.0
    %977 = vmatprep.subr.mxu0 0.0
    %978 = vmatpush1.msra.mxu0 0.0
    %979 = vmatprep.subr.mxu0 0.0
    %980 = vmatpush1.msra.mxu0 0.0
    %981 = vmatprep.subr.mxu0 0.0
    %982 = vmatpush1.msra.mxu0 0.0
    %983 = vmatprep.subr.mxu0 0.0
    %984 = vmatpush1.msra.mxu0 0.0
    %985 = vmatprep.subr.mxu0 0.0
    %986 = vmatpush1.msra.mxu0 0.0
    %987 = vmatprep.subr.mxu0 0.0
    %988 = vmatpush1.msra.mxu0 %v925
    %989 = vmatprep.subr.mxu0 0.0
    %990 = vmatpush1.msra.mxu0 %v924
    %991 = vmatprep.subr.mxu0 0.0
    %992 = vmatpush1.msra.mxu0 %v923
    %993 = vmatprep.subr.mxu0 0.0
    %994 = vmatpush1.msra.mxu0 %v922
    %995 = vmatprep.subr.mxu0 0.0
    %996 = vmatpush2.msra.mxu0 0.0
    %997 = vmatprep.subr.mxu0 0.0
    %998 = vmatpush2.msra.mxu0 0.0
    %999 = vmatprep.subr.mxu0 0.0
    %1000 = vmatpush2.msra.mxu0 0.0
    %1001 = vmatprep.subr.mxu0 0.0
    %1002 = vmatpush2.msra.mxu0 0.0
    %1003 = vmatprep.subr.mxu0 0.0
    %1004 = vmatpush2.msra.mxu0 0.0
    %1005 = vmatprep.subr.mxu0 0.0
    %1006 = vmatpush2.msra.mxu0 0.0
    %1007 = vmatprep.subr.mxu0 0.0
    %1008 = vmatpush2.msra.mxu0 0.0
    %1009 = vmatprep.subr.mxu0 0.0
    %1010 = vmatpush2.msra.mxu0 0.0
    %1011 = vmatprep.subr.mxu0 0.0
    %1012 = vmatpush2.msra.mxu0 0.0
    %1013 = vmatprep.subr.mxu0 0.0
    %1014 = vmatpush2.msra.mxu0 0.0
    %1015 = vmatprep.subr.mxu0 0.0
    %1016 = vmatpush2.msra.mxu0 0.0
    %1017 = vmatprep.subr.mxu0 0.0
    %1018 = vmatpush2.msra.mxu0 0.0
    %1019 = vmatprep.subr.mxu0 0.0
    %1020 = vmatpush2.msra.mxu0 0.0
    %1021 = vmatprep.subr.mxu0 0.0
    %1022 = vmatpush2.msra.mxu0 0.0
    %1023 = vmatprep.subr.mxu0 0.0
    %1024 = vmatpush2.msra.mxu0 0.0
    %1025 = vmatprep.subr.mxu0 0.0
    %1026 = vmatpush2.msra.mxu0 0.0
    %1027 = vmatprep.mubr.f32.mxu0 0.0
    %1028 = vmatmul.mubr.f32.gmra.mxu0 %v958
    %v1029 = vpop.f32.mrf.mxu0
    %v1030 = vadd.f32 0.0, %v1029
    %v1031 = vpop.f32.mrf.mxu0
    %1032 = vmatprep.mubr.f32.mxu0 0.0
    %1033 = vmatmul.mubr.f32.gmra.mxu0 %v961
    %v1034 = vpop.f32.mrf.mxu0
    %v1035 = vadd.f32 0.0, %v1034
    %v1036 = vpop.f32.mrf.mxu0
    %1037 = vdwg.mxu0
    %v1038 = vadd.f32 %v21, %v1030
    %v1039 = vadd.f32 %v22, %v1035
    %v1040 = vld [vmem:[%s4 + $0x40] sm:$0xff]
    %v1041 = vld [vmem:[%s4 + $0x48] sm:$0xff]
    %v1042 = vld [vmem:[%s4 + $0x50] sm:$0xff]
    %v1043 = vld [vmem:[%s4 + $0x58] sm:$0xff]
    %v1045 = vsel %vm29, %v1038, 0
    %v1048 = vsel %vm29, %v1039, 0
    %1050 = vmatprep.subr.mxu0 0.0
    %1051 = vmatpush1.msra.mxu0 0.0
    %1052 = vmatprep.subr.mxu0 0.0
    %1053 = vmatpush1.msra.mxu0 0.0
    %1054 = vmatprep.subr.mxu0 0.0
    %1055 = vmatpush1.msra.mxu0 0.0
    %1056 = vmatprep.subr.mxu0 0.0
    %1057 = vmatpush1.msra.mxu0 0.0
    %1058 = vmatprep.subr.mxu0 0.0
    %1059 = vmatpush1.msra.mxu0 0.0
    %1060 = vmatprep.subr.mxu0 0.0
    %1061 = vmatpush1.msra.mxu0 0.0
    %1062 = vmatprep.subr.mxu0 0.0
    %1063 = vmatpush1.msra.mxu0 0.0
    %1064 = vmatprep.subr.mxu0 0.0
    %1065 = vmatpush1.msra.mxu0 0.0
    %1066 = vmatprep.subr.mxu0 0.0
    %1067 = vmatpush1.msra.mxu0 0.0
    %1068 = vmatprep.subr.mxu0 0.0
    %1069 = vmatpush1.msra.mxu0 0.0
    %1070 = vmatprep.subr.mxu0 0.0
    %1071 = vmatpush1.msra.mxu0 0.0
    %1072 = vmatprep.subr.mxu0 0.0
    %1073 = vmatpush1.msra.mxu0 0.0
    %1074 = vmatprep.subr.mxu0 0.0
    %1075 = vmatpush1.msra.mxu0 %v1043
    %1076 = vmatprep.subr.mxu0 0.0
    %1077 = vmatpush1.msra.mxu0 %v1042
    %1078 = vmatprep.subr.mxu0 0.0
    %1079 = vmatpush1.msra.mxu0 %v1041
    %1080 = vmatprep.subr.mxu0 0.0
    %1081 = vmatpush1.msra.mxu0 %v1040
    %1082 = vmatprep.subr.mxu0 0.0
    %1083 = vmatpush2.msra.mxu0 0.0
    %1084 = vmatprep.subr.mxu0 0.0
    %1085 = vmatpush2.msra.mxu0 0.0
    %1086 = vmatprep.subr.mxu0 0.0
    %1087 = vmatpush2.msra.mxu0 0.0
    %1088 = vmatprep.subr.mxu0 0.0
    %1089 = vmatpush2.msra.mxu0 0.0
    %1090 = vmatprep.subr.mxu0 0.0
    %1091 = vmatpush2.msra.mxu0 0.0
    %1092 = vmatprep.subr.mxu0 0.0
    %1093 = vmatpush2.msra.mxu0 0.0
    %1094 = vmatprep.subr.mxu0 0.0
    %1095 = vmatpush2.msra.mxu0 0.0
    %1096 = vmatprep.subr.mxu0 0.0
    %1097 = vmatpush2.msra.mxu0 0.0
    %1098 = vmatprep.subr.mxu0 0.0
    %1099 = vmatpush2.msra.mxu0 0.0
    %1100 = vmatprep.subr.mxu0 0.0
    %1101 = vmatpush2.msra.mxu0 0.0
    %1102 = vmatprep.subr.mxu0 0.0
    %1103 = vmatpush2.msra.mxu0 0.0
    %1104 = vmatprep.subr.mxu0 0.0
    %1105 = vmatpush2.msra.mxu0 0.0
    %1106 = vmatprep.subr.mxu0 0.0
    %1107 = vmatpush2.msra.mxu0 0.0
    %1108 = vmatprep.subr.mxu0 0.0
    %1109 = vmatpush2.msra.mxu0 0.0
    %1110 = vmatprep.subr.mxu0 0.0
    %1111 = vmatpush2.msra.mxu0 0.0
    %1112 = vmatprep.subr.mxu0 0.0
    %1113 = vmatpush2.msra.mxu0 0.0
    %1114 = vmatprep.mubr.f32.mxu0 0.0
    %1115 = vmatmul.mubr.f32.gmra.mxu0 %v1045
    %v1116 = vpop.f32.mrf.mxu0
    %v1117 = vadd.f32 0.0, %v1116
    %v1118 = vpop.f32.mrf.mxu0
    %1119 = vmatprep.mubr.f32.mxu0 0.0
    %1120 = vmatmul.mubr.f32.gmra.mxu0 %v1048
    %v1121 = vpop.f32.mrf.mxu0
    %v1122 = vadd.f32 0.0, %v1121
    %v1123 = vpop.f32.mrf.mxu0
    %1124 = vdwg.mxu0
    %v1125 = vld [vmem:[%s4 + $0x60] sm:$0xff]
    %v1126 = vld [vmem:[%s4 + $0x68] sm:$0xff]
    %v1127 = vld [vmem:[%s4 + $0x70] sm:$0xff]
    %v1128 = vld [vmem:[%s4 + $0x78] sm:$0xff]
    %v1130 = vsel %vm29, %v23, 0
    %v1133 = vsel %vm29, %v24, 0
    %1135 = vmatprep.subr.mxu0 0.0
    %1136 = vmatpush1.msra.mxu0 0.0
    %1137 = vmatprep.subr.mxu0 0.0
    %1138 = vmatpush1.msra.mxu0 0.0
    %1139 = vmatprep.subr.mxu0 0.0
    %1140 = vmatpush1.msra.mxu0 0.0
    %1141 = vmatprep.subr.mxu0 0.0
    %1142 = vmatpush1.msra.mxu0 0.0
    %1143 = vmatprep.subr.mxu0 0.0
    %1144 = vmatpush1.msra.mxu0 0.0
    %1145 = vmatprep.subr.mxu0 0.0
    %1146 = vmatpush1.msra.mxu0 0.0
    %1147 = vmatprep.subr.mxu0 0.0
    %1148 = vmatpush1.msra.mxu0 0.0
    %1149 = vmatprep.subr.mxu0 0.0
    %1150 = vmatpush1.msra.mxu0 0.0
    %1151 = vmatprep.subr.mxu0 0.0
    %1152 = vmatpush1.msra.mxu0 0.0
    %1153 = vmatprep.subr.mxu0 0.0
    %1154 = vmatpush1.msra.mxu0 0.0
    %1155 = vmatprep.subr.mxu0 0.0
    %1156 = vmatpush1.msra.mxu0 0.0
    %1157 = vmatprep.subr.mxu0 0.0
    %1158 = vmatpush1.msra.mxu0 0.0
    %1159 = vmatprep.subr.mxu0 0.0
    %1160 = vmatpush1.msra.mxu0 %v1128
    %1161 = vmatprep.subr.mxu0 0.0
    %1162 = vmatpush1.msra.mxu0 %v1127
    %1163 = vmatprep.subr.mxu0 0.0
    %1164 = vmatpush1.msra.mxu0 %v1126
    %1165 = vmatprep.subr.mxu0 0.0
    %1166 = vmatpush1.msra.mxu0 %v1125
    %1167 = vmatprep.subr.mxu0 0.0
    %1168 = vmatpush2.msra.mxu0 0.0
    %1169 = vmatprep.subr.mxu0 0.0
    %1170 = vmatpush2.msra.mxu0 0.0
    %1171 = vmatprep.subr.mxu0 0.0
    %1172 = vmatpush2.msra.mxu0 0.0
    %1173 = vmatprep.subr.mxu0 0.0
    %1174 = vmatpush2.msra.mxu0 0.0
    %1175 = vmatprep.subr.mxu0 0.0
    %1176 = vmatpush2.msra.mxu0 0.0
    %1177 = vmatprep.subr.mxu0 0.0
    %1178 = vmatpush2.msra.mxu0 0.0
    %1179 = vmatprep.subr.mxu0 0.0
    %1180 = vmatpush2.msra.mxu0 0.0
    %1181 = vmatprep.subr.mxu0 0.0
    %1182 = vmatpush2.msra.mxu0 0.0
    %1183 = vmatprep.subr.mxu0 0.0
    %1184 = vmatpush2.msra.mxu0 0.0
    %1185 = vmatprep.subr.mxu0 0.0
    %1186 = vmatpush2.msra.mxu0 0.0
    %1187 = vmatprep.subr.mxu0 0.0
    %1188 = vmatpush2.msra.mxu0 0.0
    %1189 = vmatprep.subr.mxu0 0.0
    %1190 = vmatpush2.msra.mxu0 0.0
    %1191 = vmatprep.subr.mxu0 0.0
    %1192 = vmatpush2.msra.mxu0 0.0
    %1193 = vmatprep.subr.mxu0 0.0
    %1194 = vmatpush2.msra.mxu0 0.0
    %1195 = vmatprep.subr.mxu0 0.0
    %1196 = vmatpush2.msra.mxu0 0.0
    %1197 = vmatprep.subr.mxu0 0.0
    %1198 = vmatpush2.msra.mxu0 0.0
    %1199 = vmatprep.mubr.f32.mxu0 0.0
    %1200 = vmatmul.mubr.f32.gmra.mxu0 %v1130
    %v1201 = vpop.f32.mrf.mxu0
    %v1202 = vadd.f32 0.0, %v1201
    %v1203 = vpop.f32.mrf.mxu0
    %1204 = vmatprep.mubr.f32.mxu0 0.0
    %1205 = vmatmul.mubr.f32.gmra.mxu0 %v1133
    %v1206 = vpop.f32.mrf.mxu0
    %v1207 = vadd.f32 0.0, %v1206
    %v1208 = vpop.f32.mrf.mxu0
    %1209 = vdwg.mxu0
    %v1210 = vld [vmem:[%s3] sm:$0xff]
    %v1211 = vld [vmem:[%s3 + $0x8] sm:$0xff]
    %v1213 = vsel %vm119, %v1117, 0
    %v1216 = vsel %vm119, %v1122, 0
    %v1219 = vsel %vm119, %v1202, 0
    %v1222 = vsel %vm119, %v1207, 0
    %1224 = vmatprep.subr.mxu0 0.0
    %1225 = vmatpush1.xpose.msra.mxu0 0.0
    %1226 = vmatprep.subr.mxu0 0.0
    %1227 = vmatpush1.xpose.msra.mxu0 0.0
    %1228 = vmatprep.subr.mxu0 0.0
    %1229 = vmatpush1.xpose.msra.mxu0 0.0
    %1230 = vmatprep.subr.mxu0 0.0
    %1231 = vmatpush1.xpose.msra.mxu0 0.0
    %1232 = vmatprep.subr.mxu0 0.0
    %1233 = vmatpush1.xpose.msra.mxu0 0.0
    %1234 = vmatprep.subr.mxu0 0.0
    %1235 = vmatpush1.xpose.msra.mxu0 0.0
    %1236 = vmatprep.subr.mxu0 0.0
    %1237 = vmatpush1.xpose.msra.mxu0 0.0
    %1238 = vmatprep.subr.mxu0 0.0
    %1239 = vmatpush1.xpose.msra.mxu0 0.0
    %1240 = vmatprep.subr.mxu0 0.0
    %1241 = vmatpush1.xpose.msra.mxu0 0.0
    %1242 = vmatprep.subr.mxu0 0.0
    %1243 = vmatpush1.xpose.msra.mxu0 0.0
    %1244 = vmatprep.subr.mxu0 0.0
    %1245 = vmatpush1.xpose.msra.mxu0 0.0
    %1246 = vmatprep.subr.mxu0 0.0
    %1247 = vmatpush1.xpose.msra.mxu0 0.0
    %1248 = vmatprep.subr.mxu0 0.0
    %1249 = vmatpush1.xpose.msra.mxu0 0.0
    %1250 = vmatprep.subr.mxu0 0.0
    %1251 = vmatpush1.xpose.msra.mxu0 0.0
    %1252 = vmatprep.subr.mxu0 0.0
    %1253 = vmatpush1.xpose.msra.mxu0 %v1222
    %1254 = vmatprep.subr.mxu0 0.0
    %1255 = vmatpush1.xpose.msra.mxu0 %v1219
    %1256 = vmatprep.subr.mxu0 0.0
    %1257 = vmatpush2.xpose.msra.mxu0 0.0
    %1258 = vmatprep.subr.mxu0 0.0
    %1259 = vmatpush2.xpose.msra.mxu0 0.0
    %1260 = vmatprep.subr.mxu0 0.0
    %1261 = vmatpush2.xpose.msra.mxu0 0.0
    %1262 = vmatprep.subr.mxu0 0.0
    %1263 = vmatpush2.xpose.msra.mxu0 0.0
    %1264 = vmatprep.subr.mxu0 0.0
    %1265 = vmatpush2.xpose.msra.mxu0 0.0
    %1266 = vmatprep.subr.mxu0 0.0
    %1267 = vmatpush2.xpose.msra.mxu0 0.0
    %1268 = vmatprep.subr.mxu0 0.0
    %1269 = vmatpush2.xpose.msra.mxu0 0.0
    %1270 = vmatprep.subr.mxu0 0.0
    %1271 = vmatpush2.xpose.msra.mxu0 0.0
    %1272 = vmatprep.subr.mxu0 0.0
    %1273 = vmatpush2.xpose.msra.mxu0 0.0
    %1274 = vmatprep.subr.mxu0 0.0
    %1275 = vmatpush2.xpose.msra.mxu0 0.0
    %1276 = vmatprep.subr.mxu0 0.0
    %1277 = vmatpush2.xpose.msra.mxu0 0.0
    %1278 = vmatprep.subr.mxu0 0.0
    %1279 = vmatpush2.xpose.msra.mxu0 0.0
    %1280 = vmatprep.subr.mxu0 0.0
    %1281 = vmatpush2.xpose.msra.mxu0 0.0
    %1282 = vmatprep.subr.mxu0 0.0
    %1283 = vmatpush2.xpose.msra.mxu0 0.0
    %1284 = vmatprep.subr.mxu0 0.0
    %1285 = vmatpush2.xpose.msra.mxu0 0.0
    %1286 = vmatprep.subr.mxu0 0.0
    %1287 = vmatpush2.xpose.msra.mxu0 0.0
    %1288 = vmatprep.mubr.f32.mxu0 0.0
    %1289 = vmatmul.mubr.f32.gmra.mxu0 %v1213
    %v1290 = vpop.f32.mrf.mxu0
    %v1291 = vadd.f32 %v1210, %v1290
    %v1292 = vpop.f32.mrf.mxu0
    %1293 = vmatprep.mubr.f32.mxu0 0.0
    %1294 = vmatmul.mubr.f32.gmra.mxu0 %v1216
    %v1295 = vpop.f32.mrf.mxu0
    %v1296 = vadd.f32 %v1211, %v1295
    %v1297 = vpop.f32.mrf.mxu0
    %1298 = vdwg.mxu0
    %v1299 = vsel %vm203, %v1291, -inf
    %1300 = vmax.xlane.f32.xlu0 %v1299
    %v1301 = vpop.xlane.xlu0 %1300
    %v1302 = vsel %vm203, %v1296, -inf
    %1303 = vmax.xlane.f32.xlu0 %v1302
    %v1304 = vpop.xlane.xlu0 %1303
    %v1305 = vsub.f32 %v1291, %v1301
    %v1306 = vsub.f32 %v1296, %v1304
    %v1307 = vmul.f32 %v1305, 1.442695
    %v1308 = vpow.pop %v1307
    %v1309 = vmul.f32 %v1306, 1.442695
    %v1310 = vpow.pop %v1309
    %v1311 = vsel %vm203, %v1308, 0.0
    %1312 = vadd.xlane.f32.xlu0 %v1311
    %v1313 = vpop.xlane.xlu0 %1312
    %v1314 = vsel %vm203, %v1310, 0.0
    %1315 = vadd.xlane.f32.xlu0 %v1314
    %v1316 = vpop.xlane.xlu0 %1315
    %1317 = vrot.lane.b32.xlu0 %v1202, 96
    %v1318 = vpop.permute.xlu0 %1317
    %1319 = vrot.lane.b32.xlu0 %v1207, 96
    %v1320 = vpop.permute.xlu0 %1319
    %v1324 = vsel %vm203, %v1308, 0
    %v1327 = vsel %vm203, %v1310, 0
    %1329 = vmatprep.subr.mxu0 0.0
    %1330 = vmatpush1.msra.mxu0 0.0
    %1331 = vmatprep.subr.mxu0 0.0
    %1332 = vmatpush1.msra.mxu0 0.0
    %1333 = vmatprep.subr.mxu0 0.0
    %1334 = vmatpush1.msra.mxu0 0.0
    %1335 = vmatprep.subr.mxu0 0.0
    %1336 = vmatpush1.msra.mxu0 0.0
    %1337 = vmatprep.subr.mxu0 0.0
    %1338 = vmatpush1.msra.mxu0 0.0
    %1339 = vmatprep.subr.mxu0 0.0
    %1340 = vmatpush1.msra.mxu0 0.0
    %1341 = vmatprep.subr.mxu0 0.0
    %1342 = vmatpush1.msra.mxu0 0.0
    %1343 = vmatprep.subr.mxu0 0.0
    %1344 = vmatpush1.msra.mxu0 0.0
    %1345 = vmatprep.subr.mxu0 0.0
    %1346 = vmatpush1.msra.mxu0 0.0
    %1347 = vmatprep.subr.mxu0 0.0
    %1348 = vmatpush1.msra.mxu0 0.0
    %1349 = vmatprep.subr.mxu0 0.0
    %1350 = vmatpush1.msra.mxu0 0.0
    %1351 = vmatprep.subr.mxu0 0.0
    %1352 = vmatpush1.msra.mxu0 0.0
    %1353 = vmatprep.subr.mxu0 0.0
    %1354 = vmatpush1.msra.mxu0 0.0
    %1355 = vmatprep.subr.mxu0 0.0
    %1356 = vmatpush1.msra.mxu0 0.0
    %1357 = vmatprep.subr.mxu0 0.0
    %1358 = vmatpush1.msra.mxu0 %v1320
    %1359 = vmatprep.subr.mxu0 0.0
    %1360 = vmatpush1.msra.mxu0 %v1318
    %1361 = vmatprep.subr.mxu0 0.0
    %1362 = vmatpush2.msra.mxu0 0.0
    %1363 = vmatprep.subr.mxu0 0.0
    %1364 = vmatpush2.msra.mxu0 0.0
    %1365 = vmatprep.subr.mxu0 0.0
    %1366 = vmatpush2.msra.mxu0 0.0
    %1367 = vmatprep.subr.mxu0 0.0
    %1368 = vmatpush2.msra.mxu0 0.0
    %1369 = vmatprep.subr.mxu0 0.0
    %1370 = vmatpush2.msra.mxu0 0.0
    %1371 = vmatprep.subr.mxu0 0.0
    %1372 = vmatpush2.msra.mxu0 0.0
    %1373 = vmatprep.subr.mxu0 0.0
    %1374 = vmatpush2.msra.mxu0 0.0
    %1375 = vmatprep.subr.mxu0 0.0
    %1376 = vmatpush2.msra.mxu0 0.0
    %1377 = vmatprep.subr.mxu0 0.0
    %1378 = vmatpush2.msra.mxu0 0.0
    %1379 = vmatprep.subr.mxu0 0.0
    %1380 = vmatpush2.msra.mxu0 0.0
    %1381 = vmatprep.subr.mxu0 0.0
    %1382 = vmatpush2.msra.mxu0 0.0
    %1383 = vmatprep.subr.mxu0 0.0
    %1384 = vmatpush2.msra.mxu0 0.0
    %1385 = vmatprep.subr.mxu0 0.0
    %1386 = vmatpush2.msra.mxu0 0.0
    %1387 = vmatprep.subr.mxu0 0.0
    %1388 = vmatpush2.msra.mxu0 0.0
    %1389 = vmatprep.subr.mxu0 0.0
    %1390 = vmatpush2.msra.mxu0 0.0
    %1391 = vmatprep.subr.mxu0 0.0
    %1392 = vmatpush2.msra.mxu0 0.0
    %1393 = vmatprep.mubr.f32.mxu0 0.0
    %1394 = vmatmul.mubr.f32.gmra.mxu0 %v1324
    %v1395 = vpop.f32.mrf.mxu0
    %v1396 = vadd.f32 0.0, %v1395
    %v1397 = vpop.f32.mrf.mxu0
    %1398 = vmatprep.mubr.f32.mxu0 0.0
    %1399 = vmatmul.mubr.f32.gmra.mxu0 %v1327
    %v1400 = vpop.f32.mrf.mxu0
    %v1401 = vadd.f32 0.0, %v1400
    %v1402 = vpop.f32.mrf.mxu0
    %1403 = vdwg.mxu0
    %v1404 = vrcp.pop %v1313
    %v1405 = vrcp.pop %v1316
    %v1406 = vmul.f32 %v1396, %v1404
    %v1407 = vmul.f32 %v1401, %v1405
    %s1408 = scalar_lea.vmem %s3, 16
    %v1409 = vld [vmem:[%s1408] sm:$0xff]
    %v1410 = vld [vmem:[%s1408 + $0x8] sm:$0xff]
    %1411 = vrot.lane.b32.xlu0 %v1117, 120
    %v1412 = vpop.permute.xlu0 %1411
    %1413 = vrot.lane.b32.xlu0 %v1122, 120
    %v1414 = vpop.permute.xlu0 %1413
    %1415 = vrot.lane.b32.xlu0 %v1202, 120
    %v1416 = vpop.permute.xlu0 %1415
    %1417 = vrot.lane.b32.xlu0 %v1207, 120
    %v1418 = vpop.permute.xlu0 %1417
    %v1419 = vsel %vm119, %v1412, 0
    %v1421 = vsel %vm119, %v1414, 0
    %v1423 = vsel %vm119, %v1416, 0
    %v1425 = vsel %vm119, %v1418, 0
    %1427 = vmatprep.subr.mxu0 0.0
    %1428 = vmatpush1.xpose.msra.mxu0 0.0
    %1429 = vmatprep.subr.mxu0 0.0
    %1430 = vmatpush1.xpose.msra.mxu0 0.0
    %1431 = vmatprep.subr.mxu0 0.0
    %1432 = vmatpush1.xpose.msra.mxu0 0.0
    %1433 = vmatprep.subr.mxu0 0.0
    %1434 = vmatpush1.xpose.msra.mxu0 0.0
    %1435 = vmatprep.subr.mxu0 0.0
    %1436 = vmatpush1.xpose.msra.mxu0 0.0
    %1437 = vmatprep.subr.mxu0 0.0
    %1438 = vmatpush1.xpose.msra.mxu0 0.0
    %1439 = vmatprep.subr.mxu0 0.0
    %1440 = vmatpush1.xpose.msra.mxu0 0.0
    %1441 = vmatprep.subr.mxu0 0.0
    %1442 = vmatpush1.xpose.msra.mxu0 0.0
    %1443 = vmatprep.subr.mxu0 0.0
    %1444 = vmatpush1.xpose.msra.mxu0 0.0
    %1445 = vmatprep.subr.mxu0 0.0
    %1446 = vmatpush1.xpose.msra.mxu0 0.0
    %1447 = vmatprep.subr.mxu0 0.0
    %1448 = vmatpush1.xpose.msra.mxu0 0.0
    %1449 = vmatprep.subr.mxu0 0.0
    %1450 = vmatpush1.xpose.msra.mxu0 0.0
    %1451 = vmatprep.subr.mxu0 0.0
    %1452 = vmatpush1.xpose.msra.mxu0 0.0
    %1453 = vmatprep.subr.mxu0 0.0
    %1454 = vmatpush1.xpose.msra.mxu0 0.0
    %1455 = vmatprep.subr.mxu0 0.0
    %1456 = vmatpush1.xpose.msra.mxu0 %v1425
    %1457 = vmatprep.subr.mxu0 0.0
    %1458 = vmatpush1.xpose.msra.mxu0 %v1423
    %1459 = vmatprep.subr.mxu0 0.0
    %1460 = vmatpush2.xpose.msra.mxu0 0.0
    %1461 = vmatprep.subr.mxu0 0.0
    %1462 = vmatpush2.xpose.msra.mxu0 0.0
    %1463 = vmatprep.subr.mxu0 0.0
    %1464 = vmatpush2.xpose.msra.mxu0 0.0
    %1465 = vmatprep.subr.mxu0 0.0
    %1466 = vmatpush2.xpose.msra.mxu0 0.0
    %1467 = vmatprep.subr.mxu0 0.0
    %1468 = vmatpush2.xpose.msra.mxu0 0.0
    %1469 = vmatprep.subr.mxu0 0.0
    %1470 = vmatpush2.xpose.msra.mxu0 0.0
    %1471 = vmatprep.subr.mxu0 0.0
    %1472 = vmatpush2.xpose.msra.mxu0 0.0
    %1473 = vmatprep.subr.mxu0 0.0
    %1474 = vmatpush2.xpose.msra.mxu0 0.0
    %1475 = vmatprep.subr.mxu0 0.0
    %1476 = vmatpush2.xpose.msra.mxu0 0.0
    %1477 = vmatprep.subr.mxu0 0.0
    %1478 = vmatpush2.xpose.msra.mxu0 0.0
    %1479 = vmatprep.subr.mxu0 0.0
    %1480 = vmatpush2.xpose.msra.mxu0 0.0
    %1481 = vmatprep.subr.mxu0 0.0
    %1482 = vmatpush2.xpose.msra.mxu0 0.0
    %1483 = vmatprep.subr.mxu0 0.0
    %1484 = vmatpush2.xpose.msra.mxu0 0.0
    %1485 = vmatprep.subr.mxu0 0.0
    %1486 = vmatpush2.xpose.msra.mxu0 0.0
    %1487 = vmatprep.subr.mxu0 0.0
    %1488 = vmatpush2.xpose.msra.mxu0 0.0
    %1489 = vmatprep.subr.mxu0 0.0
    %1490 = vmatpush2.xpose.msra.mxu0 0.0
    %1491 = vmatprep.mubr.f32.mxu0 0.0
    %1492 = vmatmul.mubr.f32.gmra.mxu0 %v1419
    %v1493 = vpop.f32.mrf.mxu0
    %v1494 = vadd.f32 %v1409, %v1493
    %v1495 = vpop.f32.mrf.mxu0
    %1496 = vmatprep.mubr.f32.mxu0 0.0
    %1497 = vmatmul.mubr.f32.gmra.mxu0 %v1421
    %v1498 = vpop.f32.mrf.mxu0
    %v1499 = vadd.f32 %v1410, %v1498
    %v1500 = vpop.f32.mrf.mxu0
    %1501 = vdwg.mxu0
    %v1502 = vsel %vm203, %v1494, -inf
    %1503 = vmax.xlane.f32.xlu0 %v1502
    %v1504 = vpop.xlane.xlu0 %1503
    %v1505 = vsel %vm203, %v1499, -inf
    %1506 = vmax.xlane.f32.xlu0 %v1505
    %v1507 = vpop.xlane.xlu0 %1506
    %v1508 = vsub.f32 %v1494, %v1504
    %v1509 = vsub.f32 %v1499, %v1507
    %v1510 = vmul.f32 %v1508, 1.442695
    %v1511 = vpow.pop %v1510
    %v1512 = vmul.f32 %v1509, 1.442695
    %v1513 = vpow.pop %v1512
    %v1514 = vsel %vm203, %v1511, 0.0
    %1515 = vadd.xlane.f32.xlu0 %v1514
    %v1516 = vpop.xlane.xlu0 %1515
    %v1517 = vsel %vm203, %v1513, 0.0
    %1518 = vadd.xlane.f32.xlu0 %v1517
    %v1519 = vpop.xlane.xlu0 %1518
    %1520 = vrot.lane.b32.xlu0 %v1202, 88
    %v1521 = vpop.permute.xlu0 %1520
    %1522 = vrot.lane.b32.xlu0 %v1207, 88
    %v1523 = vpop.permute.xlu0 %1522
    %v1527 = vsel %vm203, %v1511, 0
    %v1530 = vsel %vm203, %v1513, 0
    %1532 = vmatprep.subr.mxu0 0.0
    %1533 = vmatpush1.msra.mxu0 0.0
    %1534 = vmatprep.subr.mxu0 0.0
    %1535 = vmatpush1.msra.mxu0 0.0
    %1536 = vmatprep.subr.mxu0 0.0
    %1537 = vmatpush1.msra.mxu0 0.0
    %1538 = vmatprep.subr.mxu0 0.0
    %1539 = vmatpush1.msra.mxu0 0.0
    %1540 = vmatprep.subr.mxu0 0.0
    %1541 = vmatpush1.msra.mxu0 0.0
    %1542 = vmatprep.subr.mxu0 0.0
    %1543 = vmatpush1.msra.mxu0 0.0
    %1544 = vmatprep.subr.mxu0 0.0
    %1545 = vmatpush1.msra.mxu0 0.0
    %1546 = vmatprep.subr.mxu0 0.0
    %1547 = vmatpush1.msra.mxu0 0.0
    %1548 = vmatprep.subr.mxu0 0.0
    %1549 = vmatpush1.msra.mxu0 0.0
    %1550 = vmatprep.subr.mxu0 0.0
    %1551 = vmatpush1.msra.mxu0 0.0
    %1552 = vmatprep.subr.mxu0 0.0
    %1553 = vmatpush1.msra.mxu0 0.0
    %1554 = vmatprep.subr.mxu0 0.0
    %1555 = vmatpush1.msra.mxu0 0.0
    %1556 = vmatprep.subr.mxu0 0.0
    %1557 = vmatpush1.msra.mxu0 0.0
    %1558 = vmatprep.subr.mxu0 0.0
    %1559 = vmatpush1.msra.mxu0 0.0
    %1560 = vmatprep.subr.mxu0 0.0
    %1561 = vmatpush1.msra.mxu0 %v1523
    %1562 = vmatprep.subr.mxu0 0.0
    %1563 = vmatpush1.msra.mxu0 %v1521
    %1564 = vmatprep.subr.mxu0 0.0
    %1565 = vmatpush2.msra.mxu0 0.0
    %1566 = vmatprep.subr.mxu0 0.0
    %1567 = vmatpush2.msra.mxu0 0.0
    %1568 = vmatprep.subr.mxu0 0.0
    %1569 = vmatpush2.msra.mxu0 0.0
    %1570 = vmatprep.subr.mxu0 0.0
    %1571 = vmatpush2.msra.mxu0 0.0
    %1572 = vmatprep.subr.mxu0 0.0
    %1573 = vmatpush2.msra.mxu0 0.0
    %1574 = vmatprep.subr.mxu0 0.0
    %1575 = vmatpush2.msra.mxu0 0.0
    %1576 = vmatprep.subr.mxu0 0.0
    %1577 = vmatpush2.msra.mxu0 0.0
    %1578 = vmatprep.subr.mxu0 0.0
    %1579 = vmatpush2.msra.mxu0 0.0
    %1580 = vmatprep.subr.mxu0 0.0
    %1581 = vmatpush2.msra.mxu0 0.0
    %1582 = vmatprep.subr.mxu0 0.0
    %1583 = vmatpush2.msra.mxu0 0.0
    %1584 = vmatprep.subr.mxu0 0.0
    %1585 = vmatpush2.msra.mxu0 0.0
    %1586 = vmatprep.subr.mxu0 0.0
    %1587 = vmatpush2.msra.mxu0 0.0
    %1588 = vmatprep.subr.mxu0 0.0
    %1589 = vmatpush2.msra.mxu0 0.0
    %1590 = vmatprep.subr.mxu0 0.0
    %1591 = vmatpush2.msra.mxu0 0.0
    %1592 = vmatprep.subr.mxu0 0.0
    %1593 = vmatpush2.msra.mxu0 0.0
    %1594 = vmatprep.subr.mxu0 0.0
    %1595 = vmatpush2.msra.mxu0 0.0
    %1596 = vmatprep.mubr.f32.mxu0 0.0
    %1597 = vmatmul.mubr.f32.gmra.mxu0 %v1527
    %v1598 = vpop.f32.mrf.mxu0
    %v1599 = vadd.f32 0.0, %v1598
    %v1600 = vpop.f32.mrf.mxu0
    %1601 = vmatprep.mubr.f32.mxu0 0.0
    %1602 = vmatmul.mubr.f32.gmra.mxu0 %v1530
    %v1603 = vpop.f32.mrf.mxu0
    %v1604 = vadd.f32 0.0, %v1603
    %v1605 = vpop.f32.mrf.mxu0
    %1606 = vdwg.mxu0
    %v1607 = vrcp.pop %v1516
    %v1608 = vrcp.pop %v1519
    %v1609 = vmul.f32 %v1599, %v1607
    %v1610 = vmul.f32 %v1604, %v1608
    %s1611 = scalar_lea.vmem %s3, 32
    %v1612 = vld [vmem:[%s1611] sm:$0xff]
    %v1613 = vld [vmem:[%s1611 + $0x8] sm:$0xff]
    %1614 = vrot.lane.b32.xlu0 %v1117, 112
    %v1615 = vpop.permute.xlu0 %1614
    %1616 = vrot.lane.b32.xlu0 %v1122, 112
    %v1617 = vpop.permute.xlu0 %1616
    %1618 = vrot.lane.b32.xlu0 %v1202, 112
    %v1619 = vpop.permute.xlu0 %1618
    %1620 = vrot.lane.b32.xlu0 %v1207, 112
    %v1621 = vpop.permute.xlu0 %1620
    %v1622 = vsel %vm119, %v1615, 0
    %v1624 = vsel %vm119, %v1617, 0
    %v1626 = vsel %vm119, %v1619, 0
    %v1628 = vsel %vm119, %v1621, 0
    %1630 = vmatprep.subr.mxu0 0.0
    %1631 = vmatpush1.xpose.msra.mxu0 0.0
    %1632 = vmatprep.subr.mxu0 0.0
    %1633 = vmatpush1.xpose.msra.mxu0 0.0
    %1634 = vmatprep.subr.mxu0 0.0
    %1635 = vmatpush1.xpose.msra.mxu0 0.0
    %1636 = vmatprep.subr.mxu0 0.0
    %1637 = vmatpush1.xpose.msra.mxu0 0.0
    %1638 = vmatprep.subr.mxu0 0.0
    %1639 = vmatpush1.xpose.msra.mxu0 0.0
    %1640 = vmatprep.subr.mxu0 0.0
    %1641 = vmatpush1.xpose.msra.mxu0 0.0
    %1642 = vmatprep.subr.mxu0 0.0
    %1643 = vmatpush1.xpose.msra.mxu0 0.0
    %1644 = vmatprep.subr.mxu0 0.0
    %1645 = vmatpush1.xpose.msra.mxu0 0.0
    %1646 = vmatprep.subr.mxu0 0.0
    %1647 = vmatpush1.xpose.msra.mxu0 0.0
    %1648 = vmatprep.subr.mxu0 0.0
    %1649 = vmatpush1.xpose.msra.mxu0 0.0
    %1650 = vmatprep.subr.mxu0 0.0
    %1651 = vmatpush1.xpose.msra.mxu0 0.0
    %1652 = vmatprep.subr.mxu0 0.0
    %1653 = vmatpush1.xpose.msra.mxu0 0.0
    %1654 = vmatprep.subr.mxu0 0.0
    %1655 = vmatpush1.xpose.msra.mxu0 0.0
    %1656 = vmatprep.subr.mxu0 0.0
    %1657 = vmatpush1.xpose.msra.mxu0 0.0
    %1658 = vmatprep.subr.mxu0 0.0
    %1659 = vmatpush1.xpose.msra.mxu0 %v1628
    %1660 = vmatprep.subr.mxu0 0.0
    %1661 = vmatpush1.xpose.msra.mxu0 %v1626
    %1662 = vmatprep.subr.mxu0 0.0
    %1663 = vmatpush2.xpose.msra.mxu0 0.0
    %1664 = vmatprep.subr.mxu0 0.0
    %1665 = vmatpush2.xpose.msra.mxu0 0.0
    %1666 = vmatprep.subr.mxu0 0.0
    %1667 = vmatpush2.xpose.msra.mxu0 0.0
    %1668 = vmatprep.subr.mxu0 0.0
    %1669 = vmatpush2.xpose.msra.mxu0 0.0
    %1670 = vmatprep.subr.mxu0 0.0
    %1671 = vmatpush2.xpose.msra.mxu0 0.0
    %1672 = vmatprep.subr.mxu0 0.0
    %1673 = vmatpush2.xpose.msra.mxu0 0.0
    %1674 = vmatprep.subr.mxu0 0.0
    %1675 = vmatpush2.xpose.msra.mxu0 0.0
    %1676 = vmatprep.subr.mxu0 0.0
    %1677 = vmatpush2.xpose.msra.mxu0 0.0
    %1678 = vmatprep.subr.mxu0 0.0
    %1679 = vmatpush2.xpose.msra.mxu0 0.0
    %1680 = vmatprep.subr.mxu0 0.0
    %1681 = vmatpush2.xpose.msra.mxu0 0.0
    %1682 = vmatprep.subr.mxu0 0.0
    %1683 = vmatpush2.xpose.msra.mxu0 0.0
    %1684 = vmatprep.subr.mxu0 0.0
    %1685 = vmatpush2.xpose.msra.mxu0 0.0
    %1686 = vmatprep.subr.mxu0 0.0
    %1687 = vmatpush2.xpose.msra.mxu0 0.0
    %1688 = vmatprep.subr.mxu0 0.0
    %1689 = vmatpush2.xpose.msra.mxu0 0.0
    %1690 = vmatprep.subr.mxu0 0.0
    %1691 = vmatpush2.xpose.msra.mxu0 0.0
    %1692 = vmatprep.subr.mxu0 0.0
    %1693 = vmatpush2.xpose.msra.mxu0 0.0
    %1694 = vmatprep.mubr.f32.mxu0 0.0
    %1695 = vmatmul.mubr.f32.gmra.mxu0 %v1622
    %v1696 = vpop.f32.mrf.mxu0
    %v1697 = vadd.f32 %v1612, %v1696
    %v1698 = vpop.f32.mrf.mxu0
    %1699 = vmatprep.mubr.f32.mxu0 0.0
    %1700 = vmatmul.mubr.f32.gmra.mxu0 %v1624
    %v1701 = vpop.f32.mrf.mxu0
    %v1702 = vadd.f32 %v1613, %v1701
    %v1703 = vpop.f32.mrf.mxu0
    %1704 = vdwg.mxu0
    %v1705 = vsel %vm203, %v1697, -inf
    %1706 = vmax.xlane.f32.xlu0 %v1705
    %v1707 = vpop.xlane.xlu0 %1706
    %v1708 = vsel %vm203, %v1702, -inf
    %1709 = vmax.xlane.f32.xlu0 %v1708
    %v1710 = vpop.xlane.xlu0 %1709
    %v1711 = vsub.f32 %v1697, %v1707
    %v1712 = vsub.f32 %v1702, %v1710
    %v1713 = vmul.f32 %v1711, 1.442695
    %v1714 = vpow.pop %v1713
    %v1715 = vmul.f32 %v1712, 1.442695
    %v1716 = vpow.pop %v1715
    %v1717 = vsel %vm203, %v1714, 0.0
    %1718 = vadd.xlane.f32.xlu0 %v1717
    %v1719 = vpop.xlane.xlu0 %1718
    %v1720 = vsel %vm203, %v1716, 0.0
    %1721 = vadd.xlane.f32.xlu0 %v1720
    %v1722 = vpop.xlane.xlu0 %1721
    %1723 = vrot.lane.b32.xlu0 %v1202, 80
    %v1724 = vpop.permute.xlu0 %1723
    %1725 = vrot.lane.b32.xlu0 %v1207, 80
    %v1726 = vpop.permute.xlu0 %1725
    %v1730 = vsel %vm203, %v1714, 0
    %v1733 = vsel %vm203, %v1716, 0
    %1735 = vmatprep.subr.mxu0 0.0
    %1736 = vmatpush1.msra.mxu0 0.0
    %1737 = vmatprep.subr.mxu0 0.0
    %1738 = vmatpush1.msra.mxu0 0.0
    %1739 = vmatprep.subr.mxu0 0.0
    %1740 = vmatpush1.msra.mxu0 0.0
    %1741 = vmatprep.subr.mxu0 0.0
    %1742 = vmatpush1.msra.mxu0 0.0
    %1743 = vmatprep.subr.mxu0 0.0
    %1744 = vmatpush1.msra.mxu0 0.0
    %1745 = vmatprep.subr.mxu0 0.0
    %1746 = vmatpush1.msra.mxu0 0.0
    %1747 = vmatprep.subr.mxu0 0.0
    %1748 = vmatpush1.msra.mxu0 0.0
    %1749 = vmatprep.subr.mxu0 0.0
    %1750 = vmatpush1.msra.mxu0 0.0
    %1751 = vmatprep.subr.mxu0 0.0
    %1752 = vmatpush1.msra.mxu0 0.0
    %1753 = vmatprep.subr.mxu0 0.0
    %1754 = vmatpush1.msra.mxu0 0.0
    %1755 = vmatprep.subr.mxu0 0.0
    %1756 = vmatpush1.msra.mxu0 0.0
    %1757 = vmatprep.subr.mxu0 0.0
    %1758 = vmatpush1.msra.mxu0 0.0
    %1759 = vmatprep.subr.mxu0 0.0
    %1760 = vmatpush1.msra.mxu0 0.0
    %1761 = vmatprep.subr.mxu0 0.0
    %1762 = vmatpush1.msra.mxu0 0.0
    %1763 = vmatprep.subr.mxu0 0.0
    %1764 = vmatpush1.msra.mxu0 %v1726
    %1765 = vmatprep.subr.mxu0 0.0
    %1766 = vmatpush1.msra.mxu0 %v1724
    %1767 = vmatprep.subr.mxu0 0.0
    %1768 = vmatpush2.msra.mxu0 0.0
    %1769 = vmatprep.subr.mxu0 0.0
    %1770 = vmatpush2.msra.mxu0 0.0
    %1771 = vmatprep.subr.mxu0 0.0
    %1772 = vmatpush2.msra.mxu0 0.0
    %1773 = vmatprep.subr.mxu0 0.0
    %1774 = vmatpush2.msra.mxu0 0.0
    %1775 = vmatprep.subr.mxu0 0.0
    %1776 = vmatpush2.msra.mxu0 0.0
    %1777 = vmatprep.subr.mxu0 0.0
    %1778 = vmatpush2.msra.mxu0 0.0
    %1779 = vmatprep.subr.mxu0 0.0
    %1780 = vmatpush2.msra.mxu0 0.0
    %1781 = vmatprep.subr.mxu0 0.0
    %1782 = vmatpush2.msra.mxu0 0.0
    %1783 = vmatprep.subr.mxu0 0.0
    %1784 = vmatpush2.msra.mxu0 0.0
    %1785 = vmatprep.subr.mxu0 0.0
    %1786 = vmatpush2.msra.mxu0 0.0
    %1787 = vmatprep.subr.mxu0 0.0
    %1788 = vmatpush2.msra.mxu0 0.0
    %1789 = vmatprep.subr.mxu0 0.0
    %1790 = vmatpush2.msra.mxu0 0.0
    %1791 = vmatprep.subr.mxu0 0.0
    %1792 = vmatpush2.msra.mxu0 0.0
    %1793 = vmatprep.subr.mxu0 0.0
    %1794 = vmatpush2.msra.mxu0 0.0
    %1795 = vmatprep.subr.mxu0 0.0
    %1796 = vmatpush2.msra.mxu0 0.0
    %1797 = vmatprep.subr.mxu0 0.0
    %1798 = vmatpush2.msra.mxu0 0.0
    %1799 = vmatprep.mubr.f32.mxu0 0.0
    %1800 = vmatmul.mubr.f32.gmra.mxu0 %v1730
    %v1801 = vpop.f32.mrf.mxu0
    %v1802 = vadd.f32 0.0, %v1801
    %v1803 = vpop.f32.mrf.mxu0
    %1804 = vmatprep.mubr.f32.mxu0 0.0
    %1805 = vmatmul.mubr.f32.gmra.mxu0 %v1733
    %v1806 = vpop.f32.mrf.mxu0
    %v1807 = vadd.f32 0.0, %v1806
    %v1808 = vpop.f32.mrf.mxu0
    %1809 = vdwg.mxu0
    %v1810 = vrcp.pop %v1719
    %v1811 = vrcp.pop %v1722
    %v1812 = vmul.f32 %v1802, %v1810
    %v1813 = vmul.f32 %v1807, %v1811
    %s1814 = scalar_lea.vmem %s3, 48
    %v1815 = vld [vmem:[%s1814] sm:$0xff]
    %v1816 = vld [vmem:[%s1814 + $0x8] sm:$0xff]
    %1817 = vrot.lane.b32.xlu0 %v1117, 104
    %v1818 = vpop.permute.xlu0 %1817
    %1819 = vrot.lane.b32.xlu0 %v1122, 104
    %v1820 = vpop.permute.xlu0 %1819
    %1821 = vrot.lane.b32.xlu0 %v1202, 104
    %v1822 = vpop.permute.xlu0 %1821
    %1823 = vrot.lane.b32.xlu0 %v1207, 104
    %v1824 = vpop.permute.xlu0 %1823
    %v1825 = vsel %vm119, %v1818, 0
    %v1827 = vsel %vm119, %v1820, 0
    %v1829 = vsel %vm119, %v1822, 0
    %v1831 = vsel %vm119, %v1824, 0
    %1833 = vmatprep.subr.mxu0 0.0
    %1834 = vmatpush1.xpose.msra.mxu0 0.0
    %1835 = vmatprep.subr.mxu0 0.0
    %1836 = vmatpush1.xpose.msra.mxu0 0.0
    %1837 = vmatprep.subr.mxu0 0.0
    %1838 = vmatpush1.xpose.msra.mxu0 0.0
    %1839 = vmatprep.subr.mxu0 0.0
    %1840 = vmatpush1.xpose.msra.mxu0 0.0
    %1841 = vmatprep.subr.mxu0 0.0
    %1842 = vmatpush1.xpose.msra.mxu0 0.0
    %1843 = vmatprep.subr.mxu0 0.0
    %1844 = vmatpush1.xpose.msra.mxu0 0.0
    %1845 = vmatprep.subr.mxu0 0.0
    %1846 = vmatpush1.xpose.msra.mxu0 0.0
    %1847 = vmatprep.subr.mxu0 0.0
    %1848 = vmatpush1.xpose.msra.mxu0 0.0
    %1849 = vmatprep.subr.mxu0 0.0
    %1850 = vmatpush1.xpose.msra.mxu0 0.0
    %1851 = vmatprep.subr.mxu0 0.0
    %1852 = vmatpush1.xpose.msra.mxu0 0.0
    %1853 = vmatprep.subr.mxu0 0.0
    %1854 = vmatpush1.xpose.msra.mxu0 0.0
    %1855 = vmatprep.subr.mxu0 0.0
    %1856 = vmatpush1.xpose.msra.mxu0 0.0
    %1857 = vmatprep.subr.mxu0 0.0
    %1858 = vmatpush1.xpose.msra.mxu0 0.0
    %1859 = vmatprep.subr.mxu0 0.0
    %1860 = vmatpush1.xpose.msra.mxu0 0.0
    %1861 = vmatprep.subr.mxu0 0.0
    %1862 = vmatpush1.xpose.msra.mxu0 %v1831
    %1863 = vmatprep.subr.mxu0 0.0
    %1864 = vmatpush1.xpose.msra.mxu0 %v1829
    %1865 = vmatprep.subr.mxu0 0.0
    %1866 = vmatpush2.xpose.msra.mxu0 0.0
    %1867 = vmatprep.subr.mxu0 0.0
    %1868 = vmatpush2.xpose.msra.mxu0 0.0
    %1869 = vmatprep.subr.mxu0 0.0
    %1870 = vmatpush2.xpose.msra.mxu0 0.0
    %1871 = vmatprep.subr.mxu0 0.0
    %1872 = vmatpush2.xpose.msra.mxu0 0.0
    %1873 = vmatprep.subr.mxu0 0.0
    %1874 = vmatpush2.xpose.msra.mxu0 0.0
    %1875 = vmatprep.subr.mxu0 0.0
    %1876 = vmatpush2.xpose.msra.mxu0 0.0
    %1877 = vmatprep.subr.mxu0 0.0
    %1878 = vmatpush2.xpose.msra.mxu0 0.0
    %1879 = vmatprep.subr.mxu0 0.0
    %1880 = vmatpush2.xpose.msra.mxu0 0.0
    %1881 = vmatprep.subr.mxu0 0.0
    %1882 = vmatpush2.xpose.msra.mxu0 0.0
    %1883 = vmatprep.subr.mxu0 0.0
    %1884 = vmatpush2.xpose.msra.mxu0 0.0
    %1885 = vmatprep.subr.mxu0 0.0
    %1886 = vmatpush2.xpose.msra.mxu0 0.0
    %1887 = vmatprep.subr.mxu0 0.0
    %1888 = vmatpush2.xpose.msra.mxu0 0.0
    %1889 = vmatprep.subr.mxu0 0.0
    %1890 = vmatpush2.xpose.msra.mxu0 0.0
    %1891 = vmatprep.subr.mxu0 0.0
    %1892 = vmatpush2.xpose.msra.mxu0 0.0
    %1893 = vmatprep.subr.mxu0 0.0
    %1894 = vmatpush2.xpose.msra.mxu0 0.0
    %1895 = vmatprep.subr.mxu0 0.0
    %1896 = vmatpush2.xpose.msra.mxu0 0.0
    %1897 = vmatprep.mubr.f32.mxu0 0.0
    %1898 = vmatmul.mubr.f32.gmra.mxu0 %v1825
    %v1899 = vpop.f32.mrf.mxu0
    %v1900 = vadd.f32 %v1815, %v1899
    %v1901 = vpop.f32.mrf.mxu0
    %1902 = vmatprep.mubr.f32.mxu0 0.0
    %1903 = vmatmul.mubr.f32.gmra.mxu0 %v1827
    %v1904 = vpop.f32.mrf.mxu0
    %v1905 = vadd.f32 %v1816, %v1904
    %v1906 = vpop.f32.mrf.mxu0
    %1907 = vdwg.mxu0
    %v1908 = vsel %vm203, %v1900, -inf
    %1909 = vmax.xlane.f32.xlu0 %v1908
    %v1910 = vpop.xlane.xlu0 %1909
    %v1911 = vsel %vm203, %v1905, -inf
    %1912 = vmax.xlane.f32.xlu0 %v1911
    %v1913 = vpop.xlane.xlu0 %1912
    %v1914 = vsub.f32 %v1900, %v1910
    %v1915 = vsub.f32 %v1905, %v1913
    %v1916 = vmul.f32 %v1914, 1.442695
    %v1917 = vpow.pop %v1916
    %v1918 = vmul.f32 %v1915, 1.442695
    %v1919 = vpow.pop %v1918
    %v1920 = vsel %vm203, %v1917, 0.0
    %1921 = vadd.xlane.f32.xlu0 %v1920
    %v1922 = vpop.xlane.xlu0 %1921
    %v1923 = vsel %vm203, %v1919, 0.0
    %1924 = vadd.xlane.f32.xlu0 %v1923
    %v1925 = vpop.xlane.xlu0 %1924
    %1926 = vrot.lane.b32.xlu0 %v1202, 72
    %v1927 = vpop.permute.xlu0 %1926
    %1928 = vrot.lane.b32.xlu0 %v1207, 72
    %v1929 = vpop.permute.xlu0 %1928
    %v1933 = vsel %vm203, %v1917, 0
    %v1936 = vsel %vm203, %v1919, 0
    %1938 = vmatprep.subr.mxu0 0.0
    %1939 = vmatpush1.msra.mxu0 0.0
    %1940 = vmatprep.subr.mxu0 0.0
    %1941 = vmatpush1.msra.mxu0 0.0
    %1942 = vmatprep.subr.mxu0 0.0
    %1943 = vmatpush1.msra.mxu0 0.0
    %1944 = vmatprep.subr.mxu0 0.0
    %1945 = vmatpush1.msra.mxu0 0.0
    %1946 = vmatprep.subr.mxu0 0.0
    %1947 = vmatpush1.msra.mxu0 0.0
    %1948 = vmatprep.subr.mxu0 0.0
    %1949 = vmatpush1.msra.mxu0 0.0
    %1950 = vmatprep.subr.mxu0 0.0
    %1951 = vmatpush1.msra.mxu0 0.0
    %1952 = vmatprep.subr.mxu0 0.0
    %1953 = vmatpush1.msra.mxu0 0.0
    %1954 = vmatprep.subr.mxu0 0.0
    %1955 = vmatpush1.msra.mxu0 0.0
    %1956 = vmatprep.subr.mxu0 0.0
    %1957 = vmatpush1.msra.mxu0 0.0
    %1958 = vmatprep.subr.mxu0 0.0
    %1959 = vmatpush1.msra.mxu0 0.0
    %1960 = vmatprep.subr.mxu0 0.0
    %1961 = vmatpush1.msra.mxu0 0.0
    %1962 = vmatprep.subr.mxu0 0.0
    %1963 = vmatpush1.msra.mxu0 0.0
    %1964 = vmatprep.subr.mxu0 0.0
    %1965 = vmatpush1.msra.mxu0 0.0
    %1966 = vmatprep.subr.mxu0 0.0
    %1967 = vmatpush1.msra.mxu0 %v1929
    %1968 = vmatprep.subr.mxu0 0.0
    %1969 = vmatpush1.msra.mxu0 %v1927
    %1970 = vmatprep.subr.mxu0 0.0
    %1971 = vmatpush2.msra.mxu0 0.0
    %1972 = vmatprep.subr.mxu0 0.0
    %1973 = vmatpush2.msra.mxu0 0.0
    %1974 = vmatprep.subr.mxu0 0.0
    %1975 = vmatpush2.msra.mxu0 0.0
    %1976 = vmatprep.subr.mxu0 0.0
    %1977 = vmatpush2.msra.mxu0 0.0
    %1978 = vmatprep.subr.mxu0 0.0
    %1979 = vmatpush2.msra.mxu0 0.0
    %1980 = vmatprep.subr.mxu0 0.0
    %1981 = vmatpush2.msra.mxu0 0.0
    %1982 = vmatprep.subr.mxu0 0.0
    %1983 = vmatpush2.msra.mxu0 0.0
    %1984 = vmatprep.subr.mxu0 0.0
    %1985 = vmatpush2.msra.mxu0 0.0
    %1986 = vmatprep.subr.mxu0 0.0
    %1987 = vmatpush2.msra.mxu0 0.0
    %1988 = vmatprep.subr.mxu0 0.0
    %1989 = vmatpush2.msra.mxu0 0.0
    %1990 = vmatprep.subr.mxu0 0.0
    %1991 = vmatpush2.msra.mxu0 0.0
    %1992 = vmatprep.subr.mxu0 0.0
    %1993 = vmatpush2.msra.mxu0 0.0
    %1994 = vmatprep.subr.mxu0 0.0
    %1995 = vmatpush2.msra.mxu0 0.0
    %1996 = vmatprep.subr.mxu0 0.0
    %1997 = vmatpush2.msra.mxu0 0.0
    %1998 = vmatprep.subr.mxu0 0.0
    %1999 = vmatpush2.msra.mxu0 0.0
    %2000 = vmatprep.subr.mxu0 0.0
    %2001 = vmatpush2.msra.mxu0 0.0
    %2002 = vmatprep.mubr.f32.mxu0 0.0
    %2003 = vmatmul.mubr.f32.gmra.mxu0 %v1933
    %v2004 = vpop.f32.mrf.mxu0
    %v2005 = vadd.f32 0.0, %v2004
    %v2006 = vpop.f32.mrf.mxu0
    %2007 = vmatprep.mubr.f32.mxu0 0.0
    %2008 = vmatmul.mubr.f32.gmra.mxu0 %v1936
    %v2009 = vpop.f32.mrf.mxu0
    %v2010 = vadd.f32 0.0, %v2009
    %v2011 = vpop.f32.mrf.mxu0
    %2012 = vdwg.mxu0
    %v2013 = vrcp.pop %v1922
    %v2014 = vrcp.pop %v1925
    %v2015 = vmul.f32 %v2005, %v2013
    %v2016 = vmul.f32 %v2010, %v2014
    %v2017 = vld [vmem:[%s4 + $0x80] sm:$0xff]
    %v2018 = vld [vmem:[%s4 + $0x88] sm:$0xff]
    %v2019 = vld [vmem:[%s4 + $0x90] sm:$0xff]
    %v2020 = vld [vmem:[%s4 + $0x98] sm:$0xff]
    %2023 = vrot.lane.b32.xlu0 %v1609, 8
    %v2024 = vpop.permute.xlu0 %2023
    %2025 = vrot.lane.b32.xlu0 %v1610, 8
    %v2026 = vpop.permute.xlu0 %2025
    %2031 = vrot.lane.b32.xlu0 %v1812, 16
    %v2032 = vpop.permute.xlu0 %2031
    %2033 = vrot.lane.b32.xlu0 %v1813, 16
    %v2034 = vpop.permute.xlu0 %2033
    %2039 = vrot.lane.b32.xlu0 %v2015, 24
    %v2040 = vpop.permute.xlu0 %2039
    %2041 = vrot.lane.b32.xlu0 %v2016, 24
    %v2042 = vpop.permute.xlu0 %2041
    %v2045 = vsel %vm119, %v1406, %v2024
    %v2046 = vsel %vm119, %v1407, %v2026
    %v2047 = vsel %vm203, %v2045, %v2032
    %v2048 = vsel %vm203, %v2046, %v2034
    %v2049 = vsel %vm954, %v2047, %v2040
    %v2050 = vsel %vm954, %v2048, %v2042
    %v2052 = vsel %vm29, %v2049, 0
    %v2055 = vsel %vm29, %v2050, 0
    %2057 = vmatprep.subr.mxu0 0.0
    %2058 = vmatpush1.msra.mxu0 0.0
    %2059 = vmatprep.subr.mxu0 0.0
    %2060 = vmatpush1.msra.mxu0 0.0
    %2061 = vmatprep.subr.mxu0 0.0
    %2062 = vmatpush1.msra.mxu0 0.0
    %2063 = vmatprep.subr.mxu0 0.0
    %2064 = vmatpush1.msra.mxu0 0.0
    %2065 = vmatprep.subr.mxu0 0.0
    %2066 = vmatpush1.msra.mxu0 0.0
    %2067 = vmatprep.subr.mxu0 0.0
    %2068 = vmatpush1.msra.mxu0 0.0
    %2069 = vmatprep.subr.mxu0 0.0
    %2070 = vmatpush1.msra.mxu0 0.0
    %2071 = vmatprep.subr.mxu0 0.0
    %2072 = vmatpush1.msra.mxu0 0.0
    %2073 = vmatprep.subr.mxu0 0.0
    %2074 = vmatpush1.msra.mxu0 0.0
    %2075 = vmatprep.subr.mxu0 0.0
    %2076 = vmatpush1.msra.mxu0 0.0
    %2077 = vmatprep.subr.mxu0 0.0
    %2078 = vmatpush1.msra.mxu0 0.0
    %2079 = vmatprep.subr.mxu0 0.0
    %2080 = vmatpush1.msra.mxu0 0.0
    %2081 = vmatprep.subr.mxu0 0.0
    %2082 = vmatpush1.msra.mxu0 %v2020
    %2083 = vmatprep.subr.mxu0 0.0
    %2084 = vmatpush1.msra.mxu0 %v2019
    %2085 = vmatprep.subr.mxu0 0.0
    %2086 = vmatpush1.msra.mxu0 %v2018
    %2087 = vmatprep.subr.mxu0 0.0
    %2088 = vmatpush1.msra.mxu0 %v2017
    %2089 = vmatprep.subr.mxu0 0.0
    %2090 = vmatpush2.msra.mxu0 0.0
    %2091 = vmatprep.subr.mxu0 0.0
    %2092 = vmatpush2.msra.mxu0 0.0
    %2093 = vmatprep.subr.mxu0 0.0
    %2094 = vmatpush2.msra.mxu0 0.0
    %2095 = vmatprep.subr.mxu0 0.0
    %2096 = vmatpush2.msra.mxu0 0.0
    %2097 = vmatprep.subr.mxu0 0.0
    %2098 = vmatpush2.msra.mxu0 0.0
    %2099 = vmatprep.subr.mxu0 0.0
    %2100 = vmatpush2.msra.mxu0 0.0
    %2101 = vmatprep.subr.mxu0 0.0
    %2102 = vmatpush2.msra.mxu0 0.0
    %2103 = vmatprep.subr.mxu0 0.0
    %2104 = vmatpush2.msra.mxu0 0.0
    %2105 = vmatprep.subr.mxu0 0.0
    %2106 = vmatpush2.msra.mxu0 0.0
    %2107 = vmatprep.subr.mxu0 0.0
    %2108 = vmatpush2.msra.mxu0 0.0
    %2109 = vmatprep.subr.mxu0 0.0
    %2110 = vmatpush2.msra.mxu0 0.0
    %2111 = vmatprep.subr.mxu0 0.0
    %2112 = vmatpush2.msra.mxu0 0.0
    %2113 = vmatprep.subr.mxu0 0.0
    %2114 = vmatpush2.msra.mxu0 0.0
    %2115 = vmatprep.subr.mxu0 0.0
    %2116 = vmatpush2.msra.mxu0 0.0
    %2117 = vmatprep.subr.mxu0 0.0
    %2118 = vmatpush2.msra.mxu0 0.0
    %2119 = vmatprep.subr.mxu0 0.0
    %2120 = vmatpush2.msra.mxu0 0.0
    %2121 = vmatprep.mubr.f32.mxu0 0.0
    %2122 = vmatmul.mubr.f32.gmra.mxu0 %v2052
    %v2123 = vpop.f32.mrf.mxu0
    %v2124 = vadd.f32 0.0, %v2123
    %v2125 = vpop.f32.mrf.mxu0
    %2126 = vmatprep.mubr.f32.mxu0 0.0
    %2127 = vmatmul.mubr.f32.gmra.mxu0 %v2055
    %v2128 = vpop.f32.mrf.mxu0
    %v2129 = vadd.f32 0.0, %v2128
    %v2130 = vpop.f32.mrf.mxu0
    %2131 = vdwg.mxu0
    %v2132 = vadd.f32 %v1038, %v2124
    %v2133 = vadd.f32 %v1039, %v2129
    %v2134 = vld [vmem:[%s4 + $0x102] sm:$0x1]
    %v2135 = vld [vmem:[%s4 + $0x103] sm:$0x1]
    %v2136 = vsel %vm29, %v2132, 0.0
    %2137 = vadd.xlane.f32.xlu0 %v2136
    %v2138 = vpop.xlane.xlu0 %2137
    %v2139 = vsel %vm29, %v2133, 0.0
    %2140 = vadd.xlane.f32.xlu0 %v2139
    %v2141 = vpop.xlane.xlu0 %2140
    %v2142 = vrcp.pop 32.0
    %v2143 = vmul.f32 %v2138, %v2142
    %v2144 = vmul.f32 %v2141, %v2142
    %v2145 = vmul.f32 %v2132, %v2132
    %v2146 = vmul.f32 %v2133, %v2133
    %v2147 = vsel %vm29, %v2145, 0.0
    %2148 = vadd.xlane.f32.xlu0 %v2147
    %v2149 = vpop.xlane.xlu0 %2148
    %v2150 = vsel %vm29, %v2146, 0.0
    %2151 = vadd.xlane.f32.xlu0 %v2150
    %v2152 = vpop.xlane.xlu0 %2151
    %v2153 = vmul.f32 %v2149, %v2142
    %v2154 = vmul.f32 %v2152, %v2142
    %v2155 = vmul.f32 %v2143, %v2143
    %v2156 = vmul.f32 %v2144, %v2144
    %v2157 = vsub.f32 %v2153, %v2155
    %v2158 = vsub.f32 %v2154, %v2156
    %v2159 = vsub.f32 %v2132, %v2143
    %v2160 = vsub.f32 %v2133, %v2144
    %v2161 = vadd.f32 %v2157, 1e-05
    %v2162 = vadd.f32 %v2158, 1e-05
    %v2163 = vrsqrt.pop %v2161
    %v2164 = vrsqrt.pop %v2162
    %v2165 = vmul.f32 %v2159, %v2163
    %v2166 = vmul.f32 %v2160, %v2164
    %v2167 = vlaneseq
    %v2168 = vshrl.u32 %v2167, 7
    %v2169 = vsub.s32 0, %v2168
    %v2170 = vrot.slane %v2134, %v2169
    %v2171 = vmul.f32 %v2165, %v2170
    %v2172 = vmul.f32 %v2166, %v2170
    %v2173 = vlaneseq
    %v2174 = vshrl.u32 %v2173, 7
    %v2175 = vsub.s32 0, %v2174
    %v2176 = vrot.slane %v2135, %v2175
    %v2177 = vadd.f32 %v2171, %v2176
    %v2178 = vadd.f32 %v2172, %v2176
    %v2179 = vld [vmem:[%s4 + $0xa0] sm:$0xff]
    %v2180 = vld [vmem:[%s4 + $0xa8] sm:$0xff]
    %v2181 = vld [vmem:[%s4 + $0xb0] sm:$0xff]
    %v2182 = vld [vmem:[%s4 + $0xb8] sm:$0xff]
    %v2183 = vld [vmem:[%s4 + $0x100] sm:$0x1]
    %v2184 = vlaneseq
    %v2185 = vshrl.u32 %v2184, 7
    %v2186 = vsub.s32 0, %v2185
    %v2187 = vrot.slane %v2183, %v2186
    %v2189 = vsel %vm29, %v2177, 0
    %v2192 = vsel %vm29, %v2178, 0
    %2194 = vmatprep.subr.mxu0 0.0
    %2195 = vmatpush1.msra.mxu0 0.0
    %2196 = vmatprep.subr.mxu0 0.0
    %2197 = vmatpush1.msra.mxu0 0.0
    %2198 = vmatprep.subr.mxu0 0.0
    %2199 = vmatpush1.msra.mxu0 0.0
    %2200 = vmatprep.subr.mxu0 0.0
    %2201 = vmatpush1.msra.mxu0 0.0
    %2202 = vmatprep.subr.mxu0 0.0
    %2203 = vmatpush1.msra.mxu0 0.0
    %2204 = vmatprep.subr.mxu0 0.0
    %2205 = vmatpush1.msra.mxu0 0.0
    %2206 = vmatprep.subr.mxu0 0.0
    %2207 = vmatpush1.msra.mxu0 0.0
    %2208 = vmatprep.subr.mxu0 0.0
    %2209 = vmatpush1.msra.mxu0 0.0
    %2210 = vmatprep.subr.mxu0 0.0
    %2211 = vmatpush1.msra.mxu0 0.0
    %2212 = vmatprep.subr.mxu0 0.0
    %2213 = vmatpush1.msra.mxu0 0.0
    %2214 = vmatprep.subr.mxu0 0.0
    %2215 = vmatpush1.msra.mxu0 0.0
    %2216 = vmatprep.subr.mxu0 0.0
    %2217 = vmatpush1.msra.mxu0 0.0
    %2218 = vmatprep.subr.mxu0 0.0
    %2219 = vmatpush1.msra.mxu0 %v2182
    %2220 = vmatprep.subr.mxu0 0.0
    %2221 = vmatpush1.msra.mxu0 %v2181
    %2222 = vmatprep.subr.mxu0 0.0
    %2223 = vmatpush1.msra.mxu0 %v2180
    %2224 = vmatprep.subr.mxu0 0.0
    %2225 = vmatpush1.msra.mxu0 %v2179
    %2226 = vmatprep.subr.mxu0 0.0
    %2227 = vmatpush2.msra.mxu0 0.0
    %2228 = vmatprep.subr.mxu0 0.0
    %2229 = vmatpush2.msra.mxu0 0.0
    %2230 = vmatprep.subr.mxu0 0.0
    %2231 = vmatpush2.msra.mxu0 0.0
    %2232 = vmatprep.subr.mxu0 0.0
    %2233 = vmatpush2.msra.mxu0 0.0
    %2234 = vmatprep.subr.mxu0 0.0
    %2235 = vmatpush2.msra.mxu0 0.0
    %2236 = vmatprep.subr.mxu0 0.0
    %2237 = vmatpush2.msra.mxu0 0.0
    %2238 = vmatprep.subr.mxu0 0.0
    %2239 = vmatpush2.msra.mxu0 0.0
    %2240 = vmatprep.subr.mxu0 0.0
    %2241 = vmatpush2.msra.mxu0 0.0
    %2242 = vmatprep.subr.mxu0 0.0
    %2243 = vmatpush2.msra.mxu0 0.0
    %2244 = vmatprep.subr.mxu0 0.0
    %2245 = vmatpush2.msra.mxu0 0.0
    %2246 = vmatprep.subr.mxu0 0.0
    %2247 = vmatpush2.msra.mxu0 0.0
    %2248 = vmatprep.subr.mxu0 0.0
    %2249 = vmatpush2.msra.mxu0 0.0
    %2250 = vmatprep.subr.mxu0 0.0
    %2251 = vmatpush2.msra.mxu0 0.0
    %2252 = vmatprep.subr.mxu0 0.0
    %2253 = vmatpush2.msra.mxu0 0.0
    %2254 = vmatprep.subr.mxu0 0.0
    %2255 = vmatpush2.msra.mxu0 0.0
    %2256 = vmatprep.subr.mxu0 0.0
    %2257 = vmatpush2.msra.mxu0 0.0
    %2258 = vmatprep.mubr.f32.mxu0 0.0
    %2259 = vmatmul.mubr.f32.gmra.mxu0 %v2189
    %v2260 = vpop.f32.mrf.mxu0
    %v2261 = vadd.f32 %v2187, %v2260
    %v2262 = vpop.f32.mrf.mxu0
    %2263 = vmatprep.mubr.f32.mxu0 0.0
    %2264 = vmatmul.mubr.f32.gmra.mxu0 %v2192
    %v2265 = vpop.f32.mrf.mxu0
    %v2266 = vadd.f32 %v2187, %v2265
    %v2267 = vpop.f32.mrf.mxu0
    %2268 = vdwg.mxu0
    %v2269 = vmax.f32 %v2261, 0.0
    %v2270 = vmax.f32 %v2266, 0.0
    %v2271 = vld [vmem:[%s4 + $0xc0] sm:$0xff]
    %v2272 = vld [vmem:[%s4 + $0xc8] sm:$0xff]
    %v2273 = vld [vmem:[%s4 + $0xd0] sm:$0xff]
    %v2274 = vld [vmem:[%s4 + $0xd8] sm:$0xff]
    %v2275 = vld [vmem:[%s4 + $0xe0] sm:$0xff]
    %v2276 = vld [vmem:[%s4 + $0xe8] sm:$0xff]
    %v2277 = vld [vmem:[%s4 + $0xf0] sm:$0xff]
    %v2278 = vld [vmem:[%s4 + $0xf8] sm:$0xff]
    %v2279 = vld [vmem:[%s4 + $0x101] sm:$0x1]
    %v2280 = vlaneseq
    %v2281 = vshrl.u32 %v2280, 7
    %v2282 = vsub.s32 0, %v2281
    %v2283 = vrot.slane %v2279, %v2282
    %vm2284 = vcmask 523264
    %v2286 = vsel %vm2284, %v2269, 0
    %v2289 = vsel %vm2284, %v2270, 0
    %2291 = vmatprep.subr.mxu0 0.0
    %2292 = vmatpush1.msra.mxu0 0.0
    %2293 = vmatprep.subr.mxu0 0.0
    %2294 = vmatpush1.msra.mxu0 0.0
    %2295 = vmatprep.subr.mxu0 0.0
    %2296 = vmatpush1.msra.mxu0 0.0
    %2297 = vmatprep.subr.mxu0 0.0
    %2298 = vmatpush1.msra.mxu0 0.0
    %2299 = vmatprep.subr.mxu0 0.0
    %2300 = vmatpush1.msra.mxu0 0.0
    %2301 = vmatprep.subr.mxu0 0.0
    %2302 = vmatpush1.msra.mxu0 0.0
    %2303 = vmatprep.subr.mxu0 0.0
    %2304 = vmatpush1.msra.mxu0 0.0
    %2305 = vmatprep.subr.mxu0 0.0
    %2306 = vmatpush1.msra.mxu0 0.0
    %2307 = vmatprep.subr.mxu0 0.0
    %2308 = vmatpush1.msra.mxu0 %v2278
    %2309 = vmatprep.subr.mxu0 0.0
    %2310 = vmatpush1.msra.mxu0 %v2277
    %2311 = vmatprep.subr.mxu0 0.0
    %2312 = vmatpush1.msra.mxu0 %v2276
    %2313 = vmatprep.subr.mxu0 0.0
    %2314 = vmatpush1.msra.mxu0 %v2275
    %2315 = vmatprep.subr.mxu0 0.0
    %2316 = vmatpush1.msra.mxu0 %v2274
    %2317 = vmatprep.subr.mxu0 0.0
    %2318 = vmatpush1.msra.mxu0 %v2273
    %2319 = vmatprep.subr.mxu0 0.0
    %2320 = vmatpush1.msra.mxu0 %v2272
    %2321 = vmatprep.subr.mxu0 0.0
    %2322 = vmatpush1.msra.mxu0 %v2271
    %2323 = vmatprep.subr.mxu0 0.0
    %2324 = vmatpush2.msra.mxu0 0.0
    %2325 = vmatprep.subr.mxu0 0.0
    %2326 = vmatpush2.msra.mxu0 0.0
    %2327 = vmatprep.subr.mxu0 0.0
    %2328 = vmatpush2.msra.mxu0 0.0
    %2329 = vmatprep.subr.mxu0 0.0
    %2330 = vmatpush2.msra.mxu0 0.0
    %2331 = vmatprep.subr.mxu0 0.0
    %2332 = vmatpush2.msra.mxu0 0.0
    %2333 = vmatprep.subr.mxu0 0.0
    %2334 = vmatpush2.msra.mxu0 0.0
    %2335 = vmatprep.subr.mxu0 0.0
    %2336 = vmatpush2.msra.mxu0 0.0
    %2337 = vmatprep.subr.mxu0 0.0
    %2338 = vmatpush2.msra.mxu0 0.0
    %2339 = vmatprep.subr.mxu0 0.0
    %2340 = vmatpush2.msra.mxu0 0.0
    %2341 = vmatprep.subr.mxu0 0.0
    %2342 = vmatpush2.msra.mxu0 0.0
    %2343 = vmatprep.subr.mxu0 0.0
    %2344 = vmatpush2.msra.mxu0 0.0
    %2345 = vmatprep.subr.mxu0 0.0
    %2346 = vmatpush2.msra.mxu0 0.0
    %2347 = vmatprep.subr.mxu0 0.0
    %2348 = vmatpush2.msra.mxu0 0.0
    %2349 = vmatprep.subr.mxu0 0.0
    %2350 = vmatpush2.msra.mxu0 0.0
    %2351 = vmatprep.subr.mxu0 0.0
    %2352 = vmatpush2.msra.mxu0 0.0
    %2353 = vmatprep.subr.mxu0 0.0
    %2354 = vmatpush2.msra.mxu0 0.0
    %2355 = vmatprep.mubr.f32.mxu0 0.0
    %2356 = vmatmul.mubr.f32.gmra.mxu0 %v2286
    %v2357 = vpop.f32.mrf.mxu0
    %v2358 = vadd.f32 %v2283, %v2357
    %v2359 = vpop.f32.mrf.mxu0
    %2360 = vmatprep.mubr.f32.mxu0 0.0
    %2361 = vmatmul.mubr.f32.gmra.mxu0 %v2289
    %v2362 = vpop.f32.mrf.mxu0
    %v2363 = vadd.f32 %v2283, %v2362
    %v2364 = vpop.f32.mrf.mxu0
    %2365 = vdwg.mxu0
    %v2366 = vadd.f32 %v2177, %v2358
    %v2367 = vadd.f32 %v2178, %v2363
    %v2368 = vsel %vm29, %v2366, 0.0
    %2369 = vadd.xlane.f32.xlu0 %v2368
    %v2370 = vpop.xlane.xlu0 %2369
    %v2371 = vsel %vm29, %v2367, 0.0
    %2372 = vadd.xlane.f32.xlu0 %v2371
    %v2373 = vpop.xlane.xlu0 %2372
    %v2374 = vmul.f32 %v2370, %v2142
    %v2375 = vmul.f32 %v2373, %v2142
    %v2376 = vmul.f32 %v2366, %v2366
    %v2377 = vmul.f32 %v2367, %v2367
    %v2378 = vsel %vm29, %v2376, 0.0
    %2379 = vadd.xlane.f32.xlu0 %v2378
    %v2380 = vpop.xlane.xlu0 %2379
    %v2381 = vsel %vm29, %v2377, 0.0
    %2382 = vadd.xlane.f32.xlu0 %v2381
    %v2383 = vpop.xlane.xlu0 %2382
    %v2384 = vmul.f32 %v2380, %v2142
    %v2385 = vmul.f32 %v2383, %v2142
    %v2386 = vmul.f32 %v2374, %v2374
    %v2387 = vmul.f32 %v2375, %v2375
    %v2388 = vsub.f32 %v2384, %v2386
    %v2389 = vsub.f32 %v2385, %v2387
    %v2390 = vsub.f32 %v2366, %v2374
    %v2391 = vsub.f32 %v2367, %v2375
    %v2392 = vadd.f32 %v2388, 1e-05
    %v2393 = vadd.f32 %v2389, 1e-05
    %v2394 = vrsqrt.pop %v2392
    %v2395 = vrsqrt.pop %v2393
    %v2396 = vmul.f32 %v2390, %v2394
    %v2397 = vmul.f32 %v2391, %v2395
    %v2398 = vmul.f32 %v2396, %v2170
    %v2399 = vmul.f32 %v2397, %v2170
    %v2400 = vadd.f32 %v2398, %v2176
    %v2401 = vadd.f32 %v2399, %v2176
    %2402 = vst.msk [vmem:[#allocation2] sm:$0xff] %vm29, %v2400
    %2403 = vst.msk [vmem:[#allocation2 + $0x8] sm:$0xff] %vm29, %v2401
    // Predicated region
    $region22: #{run_decoder_layer.1} parent=1 // pred_check
      _
    $region23: #{run_decoder_layer.1} parent=1 // pred_check_branch
      %2405 = sbr.rel (0) target = $region25
    $region24: #{run_decoder_layer.1} parent=1 // pred_region
      %s2407 = ssub.s32 256, 256
      %2408 = vsyncadd [#allocation3], %s2407
      %s2409 = sshll.u32 [#allocation2], 4
      %s2410 = int_to_ptr.vmem [resolvable:$true] %s2409
      %2415 = dma.vmem_to_hbm [thread:$0]  %s2410, 256, %s5, [#allocation3], 128, 128, 8
    $region25: #{run_decoder_layer.1} parent=1 // pred_fallthru
      _
    // Predicated region
    $region26: #{run_decoder_layer.1} parent=1 // pred_check
      _
    $region27: #{run_decoder_layer.1} parent=1 // pred_check_branch
      %2417 = sbr.rel (0) target = $region29
    $region28: #{run_decoder_layer.1} parent=1 // pred_region
      %2418 = dma.done [#allocation3], 256
    $region29: #{run_decoder_layer.1} parent=1 // pred_fallthru
      _
    %2419 = vsyncpa [#allocation3], 1

</llo_original>
